<compile_context>
chip_gen: v7x
topology: tpu7x:2x2x1
jax: 0.10.0
libtpu: 0.0.40
codegen_flags: <defaults>
</compile_context>

<pallas_src>
import functools
import math

import jax
import jax.numpy as jnp
import numpy as np
from jax.experimental import pallas as pl
from jax.experimental.pallas import tpu as pltpu


def _round_up(x, m):
    return ((x + m - 1) // m) * m


# ----------------------------------------------------------------------------
# Path A kernel: table resident in VMEM, gather via one-hot matmul on the MXU.
# ----------------------------------------------------------------------------
def _embed_onehot_kernel(ids_ref, table_ref, out_ref, *, scale):
    ids = ids_ref[...]                                    # (tbl, 1) int32
    tbl = ids.shape[0]
    vocab = table_ref.shape[0]
    lanes = jax.lax.broadcasted_iota(jnp.int32, (tbl, vocab), 1)
    one_hot = (lanes == ids).astype(table_ref.dtype)      # (tbl, vocab)
    acc = jnp.dot(one_hot, table_ref[...],
                  preferred_element_type=jnp.float32,
                  precision=jax.lax.Precision.HIGHEST)    # exact row pick-out
    out_ref[...] = (acc * scale).astype(out_ref.dtype)


# ----------------------------------------------------------------------------
# Path B kernel: per-row DMA gather from HBM (table too big for VMEM).
# ----------------------------------------------------------------------------
def _embed_gather_kernel(ids_ref, table_hbm, out_ref, rows, sems, *,
                         tokens_per_block, scale):
    base = pl.program_id(0) * tokens_per_block

    # Issue every row DMA before waiting on any of them so they all overlap.
    copies = []
    for t in range(tokens_per_block):                     # static -> unrolled
        tok = ids_ref[base + t]                           # scalar read from SMEM
        cp = pltpu.make_async_copy(
            table_hbm.at[pl.ds(tok, 1), :],               # [1, D] row in HBM
            rows.at[pl.ds(t, 1), :],                      # [1, D] row in VMEM
            sems.at[t],
        )
        cp.start()
        copies.append(cp)
    for cp in copies:
        cp.wait()

    # Scale (VPU) and store the whole block as one slab.
    out_ref[...] = (rows[...] * scale).astype(out_ref.dtype)


# ----------------------------------------------------------------------------
# Wrapper: Embeddings.forward(x) = table[x] * sqrt(d_model)
# ----------------------------------------------------------------------------
def embeddings_pallas(ids, table, *, tokens_per_block=None):
    vocab, d_model = table.shape
    scale = math.sqrt(d_model)

    orig_shape = ids.shape
    ids_flat = ids.reshape(-1).astype(jnp.int32)
    n_tok = int(ids_flat.shape[0])

    table_bytes = vocab * d_model * jnp.dtype(table.dtype).itemsize
    use_onehot = (table_bytes <= (2 << 20)) and (vocab <= 4096)

    if tokens_per_block is None:
        tokens_per_block = 128 if use_onehot else 32

    if n_tok <= tokens_per_block:
        tbl = max(n_tok, 1)                     # single block == full array dims
    else:
        tbl = _round_up(tokens_per_block, 8)    # keep second-minor (8)-aligned
    n_total = _round_up(n_tok, tbl)
    n_pad = n_total - n_tok
    if n_pad:
        # pad with a valid id (0); padded rows are sliced off below
        ids_flat = jnp.concatenate([ids_flat, jnp.zeros((n_pad,), jnp.int32)])
    grid = (n_total // tbl,)

    if use_onehot:
        ids2d = ids_flat.reshape(n_total, 1)
        out = pl.pallas_call(
            functools.partial(_embed_onehot_kernel, scale=scale),
            out_shape=jax.ShapeDtypeStruct((n_total, d_model), table.dtype),
            grid_spec=pltpu.PrefetchScalarGridSpec(
                num_scalar_prefetch=0,
                grid=grid,
                in_specs=[
                    pl.BlockSpec((tbl, 1), lambda i: (i, 0)),          # ids block
                    pl.BlockSpec((vocab, d_model), lambda i: (0, 0)),  # table, fetched once
                ],
                out_specs=pl.BlockSpec((tbl, d_model), lambda i: (i, 0)),
            ),
            compiler_params=pltpu.CompilerParams(
                dimension_semantics=("parallel",)),
        )(ids2d, table)
    else:
        out = pl.pallas_call(
            functools.partial(_embed_gather_kernel,
                              tokens_per_block=tbl, scale=scale),
            out_shape=jax.ShapeDtypeStruct((n_total, d_model), table.dtype),
            grid_spec=pltpu.PrefetchScalarGridSpec(
                num_scalar_prefetch=1,                        # ids -> SMEM
                grid=grid,
                in_specs=[pl.BlockSpec(memory_space=pl.ANY)],  # table stays in HBM
                out_specs=pl.BlockSpec((tbl, d_model), lambda i, ids: (i, 0)),
                scratch_shapes=[
                    pltpu.VMEM((tbl, d_model), table.dtype),   # gathered rows
                    pltpu.SemaphoreType.DMA((tbl,)),           # one sem per in-flight row
                ],
            ),
            compiler_params=pltpu.CompilerParams(
                dimension_semantics=("parallel",)),
        )(ids_flat, table)

    return out[:n_tok].reshape(*orig_shape, d_model)


# ----------------------------------------------------------------------------
if __name__ == "__main__":
    VOCAB, D_MODEL = 512, 32        # vocab, d_model (small demo shapes)
    B, S = 2, 8                     # batch, sequence length of token ids
    PADDING_IDX = 0

    key = jax.random.PRNGKey(0)
    k_tab, k_ids = jax.random.split(key)

    table = 0.05 * jax.random.normal(k_tab, (VOCAB, D_MODEL), jnp.float32)
    # torch nn.Embedding(padding_idx=...) zeroes that row at init time.
    table = table.at[PADDING_IDX].set(0.0)

    ids = jax.random.randint(k_ids, (B, S), 0, VOCAB, dtype=jnp.int32)
    ids = ids.at[0, -2:].set(PADDING_IDX)   # exercise the padding row too

    y = embeddings_pallas(ids, table)
    jax.block_until_ready(y)

    # pure-JAX reference of the PyTorch forward
    y_ref = table[ids] * math.sqrt(D_MODEL)
    np.testing.assert_allclose(np.asarray(y), np.asarray(y_ref),
                               rtol=1e-6, atol=1e-6)
    assert y.shape == (B, S, D_MODEL)
    print("KERNEL_OK")
</pallas_src>

<mosaic_0001>
module attributes {stable_mosaic.version = 11 : i64} {
  func.func @_embed_onehot_kernel(%arg0: i32, %arg1: memref<16x1xi32, #tpu.memory_space<vmem>>, %arg2: memref<512x32xf32, #tpu.memory_space<vmem>>, %arg3: memref<16x32xf32, #tpu.memory_space<vmem>>) attributes {dimension_semantics = [#tpu.dimension_semantics<parallel>], iteration_bounds = array<i64: 1>, scalar_prefetch = 0 : i64, scratch_operands = 0 : i64, tpu.core_type = #tpu.core_type<tc>, window_params = [{transform_indices = @transform_0, window_bounds = array<i64: 16, 1>}, {pipeline_mode = #tpu.pipeline_mode<synchronous>, transform_indices = @transform_1, window_bounds = array<i64: 512, 32>}, {transform_indices = @transform_2, window_bounds = array<i64: 16, 32>}]} {
    %c0 = arith.constant 0 : index
    %c0_0 = arith.constant 0 : index
    %0 = vector.load %arg1[%c0, %c0_0] : memref<16x1xi32, #tpu.memory_space<vmem>>, vector<16x1xi32>
    %1 = tpu.iota {dimensions = array<i32: 1>} : vector<16x512xi32>
    %2 = vector.broadcast %0 : vector<16x1xi32> to vector<16x512xi32>
    %3 = arith.cmpi eq, %1, %2 : vector<16x512xi32>
    %4 = arith.extui %3 : vector<16x512xi1> to vector<16x512xi32>
    %5 = arith.sitofp %4 : vector<16x512xi32> to vector<16x512xf32>
    %c0_1 = arith.constant 0 : index
    %c0_2 = arith.constant 0 : index
    %6 = vector.load %arg2[%c0_1, %c0_2] : memref<512x32xf32, #tpu.memory_space<vmem>>, vector<512x32xf32>
    %cst = arith.constant dense<0.000000e+00> : vector<16x32xf32>
    %7 = tpu.matmul %5, %6, %cst {dimension_numbers = #tpu.dot_dimension_numbers<[1], [0], [0], [1], [0, 0, 1, 1], [], []>, precision = #tpu.contract_precision<fp32>} : vector<16x512xf32>, vector<512x32xf32>, vector<16x32xf32> -> vector<16x32xf32>
    %cst_3 = arith.constant 5.65685415 : f32
    %8 = vector.broadcast %cst_3 : f32 to vector<16x32xf32>
    %9 = arith.mulf %7, %8 : vector<16x32xf32>
    %c0_4 = arith.constant 0 : index
    %c0_5 = arith.constant 0 : index
    %10 = vector.load %arg3[%c0_4, %c0_5] : memref<16x32xf32, #tpu.memory_space<vmem>>, vector<16x32xf32>
    tpu.vector_store %arg3[%c0_4, %c0_5], %9 {strides = array<i32>} : memref<16x32xf32, #tpu.memory_space<vmem>>, vector<16x32xf32>,
    return
  }
  func.func @transform_0(%arg0: i32) -> (i32, i32) {
    %c0_i32 = arith.constant 0 : i32
    %c0_i32_0 = arith.constant 0 : i32
    return %arg0, %c0_i32 : i32, i32
  }
  func.func @transform_1(%arg0: i32) -> (i32, i32) {
    %c0_i32 = arith.constant 0 : i32
    %c0_i32_0 = arith.constant 0 : i32
    %c0_i32_1 = arith.constant 0 : i32
    return %c0_i32, %c0_i32_0 : i32, i32
  }
  func.func @transform_2(%arg0: i32) -> (i32, i32) {
    %c0_i32 = arith.constant 0 : i32
    %c0_i32_0 = arith.constant 0 : i32
    return %arg0, %c0_i32 : i32, i32
  }
}

</mosaic_0001>

<llo_original>
// kernel: tpu_custom_call.1
$region0: #{tpu_custom_call.1}
  #allocation0 [shape = 'u32[]', space=smem, size = 0x4, offset = 0x4, fixed_abs, tag = 'smem constant byte address 0x4 - core index']
  #allocation1 [shape = 'u32[144,128]{1,0:T(1,128)}', space=vmem, size = 0x12000, scoped, tag = 'internal scratch']
  %s0 = inlined_call_operand.vmem [shape: s32[16,1], index: 0, kind: input, shape index: {}]
  %s1 = inlined_call_operand.vmem [shape: f32[512,32], index: 1, kind: input, shape index: {}]
  %s2 = inlined_call_operand.hbm [shape: f32[16,32], index: 2, kind: output, shape index: {}]
  %s3 = sld [smem:[#allocation0]]
  $region18: #{tpu_custom_call.1} parent=0
    _
  %s5 = ssub.s32 1, %s3
  %s6 = scalar_select 0, %s5, %s3
  $region1: #{tpu_custom_call.1} parent=0
    #allocation2 [shape = 'u8[8192]{0}', space=vmem, size = 0x2000, scoped, tag = 'output window, operand 0, single buffered']
    #allocation3 [shape = 's32[1]{0}', space=sflag, size = 0x4, scoped, tag = 'scoped memory for tpu_custom_call.1']
    %7 = vsyncpa [#allocation3], 0
    // Predicated region
    $region2: #{tpu_custom_call.1} parent=1 // pred_check
      _
    $region3: #{tpu_custom_call.1} parent=1 // pred_check_branch
      %9 = sbr.rel (0) target = $region5
    $region4: #{tpu_custom_call.1} parent=1 // pred_region
      _
    $region5: #{tpu_custom_call.1} parent=1 // pred_fallthru
      _
    // Predicated region
    $region6: #{tpu_custom_call.1} parent=1 // pred_check
      _
    $region7: #{tpu_custom_call.1} parent=1 // pred_check_branch
      %11 = sbr.rel (0) target = $region9
    $region8: #{tpu_custom_call.1} parent=1 // pred_region
      _
    $region9: #{tpu_custom_call.1} parent=1 // pred_fallthru
      _
    %v12 = vld [vmem:[%s0] sm:$0xff]
    %v13 = vld [vmem:[%s0 + $0x8] sm:$0xff]
    %v14 = vlaneseq
    %v15 = vand.u32 %v14, 127
    %v16 = vadd.s32 %v15, 128
    %v17 = vadd.s32 %v15, 256
    %v18 = vadd.s32 %v15, 384
    %19 = vset.pattern.permute.xlu0 0
    %20 = vperm.xlu0 %19, %v12
    %v21 = vpop.permute.xlu0 %20
    %22 = vset.pattern.permute.xlu0 0
    %23 = vperm.xlu0 %22, %v13
    %v24 = vpop.permute.xlu0 %23
    %vm25 = vcmp.eq.s32.totalorder %v15, %v21
    %vm26 = vcmp.eq.s32.totalorder %v16, %v21
    %vm27 = vcmp.eq.s32.totalorder %v17, %v21
    %vm28 = vcmp.eq.s32.totalorder %v18, %v21
    %vm29 = vcmp.eq.s32.totalorder %v15, %v24
    %vm30 = vcmp.eq.s32.totalorder %v16, %v24
    %vm31 = vcmp.eq.s32.totalorder %v17, %v24
    %vm32 = vcmp.eq.s32.totalorder %v18, %v24
    %v33 = vsel %vm25, 1, 0
    %v34 = vsel %vm26, 1, 0
    %v35 = vsel %vm27, 1, 0
    %v36 = vsel %vm28, 1, 0
    %v37 = vsel %vm29, 1, 0
    %v38 = vsel %vm30, 1, 0
    %v39 = vsel %vm31, 1, 0
    %v40 = vsel %vm32, 1, 0
    %v41 = vcvt.s32.f32 %v33
    %v42 = vcvt.s32.f32 %v34
    %v43 = vcvt.s32.f32 %v35
    %v44 = vcvt.s32.f32 %v36
    %v45 = vcvt.s32.f32 %v37
    %v46 = vcvt.s32.f32 %v38
    %v47 = vcvt.s32.f32 %v39
    %v48 = vcvt.s32.f32 %v40
    %v49 = vld [vmem:[%s1] sm:$0xff]
    %v50 = vld [vmem:[%s1 + $0x8] sm:$0xff]
    %v51 = vld [vmem:[%s1 + $0x10] sm:$0xff]
    %v52 = vld [vmem:[%s1 + $0x18] sm:$0xff]
    %v53 = vld [vmem:[%s1 + $0x20] sm:$0xff]
    %v54 = vld [vmem:[%s1 + $0x28] sm:$0xff]
    %v55 = vld [vmem:[%s1 + $0x30] sm:$0xff]
    %v56 = vld [vmem:[%s1 + $0x38] sm:$0xff]
    %v57 = vld [vmem:[%s1 + $0x40] sm:$0xff]
    %v58 = vld [vmem:[%s1 + $0x48] sm:$0xff]
    %v59 = vld [vmem:[%s1 + $0x50] sm:$0xff]
    %v60 = vld [vmem:[%s1 + $0x58] sm:$0xff]
    %v61 = vld [vmem:[%s1 + $0x60] sm:$0xff]
    %v62 = vld [vmem:[%s1 + $0x68] sm:$0xff]
    %v63 = vld [vmem:[%s1 + $0x70] sm:$0xff]
    %v64 = vld [vmem:[%s1 + $0x78] sm:$0xff]
    %v65 = vld [vmem:[%s1 + $0x80] sm:$0xff]
    %v66 = vld [vmem:[%s1 + $0x88] sm:$0xff]
    %v67 = vld [vmem:[%s1 + $0x90] sm:$0xff]
    %v68 = vld [vmem:[%s1 + $0x98] sm:$0xff]
    %v69 = vld [vmem:[%s1 + $0xa0] sm:$0xff]
    %v70 = vld [vmem:[%s1 + $0xa8] sm:$0xff]
    %v71 = vld [vmem:[%s1 + $0xb0] sm:$0xff]
    %v72 = vld [vmem:[%s1 + $0xb8] sm:$0xff]
    %v73 = vld [vmem:[%s1 + $0xc0] sm:$0xff]
    %v74 = vld [vmem:[%s1 + $0xc8] sm:$0xff]
    %v75 = vld [vmem:[%s1 + $0xd0] sm:$0xff]
    %v76 = vld [vmem:[%s1 + $0xd8] sm:$0xff]
    %v77 = vld [vmem:[%s1 + $0xe0] sm:$0xff]
    %v78 = vld [vmem:[%s1 + $0xe8] sm:$0xff]
    %v79 = vld [vmem:[%s1 + $0xf0] sm:$0xff]
    %v80 = vld [vmem:[%s1 + $0xf8] sm:$0xff]
    %v81 = vld [vmem:[%s1 + $0x100] sm:$0xff]
    %v82 = vld [vmem:[%s1 + $0x108] sm:$0xff]
    %v83 = vld [vmem:[%s1 + $0x110] sm:$0xff]
    %v84 = vld [vmem:[%s1 + $0x118] sm:$0xff]
    %v85 = vld [vmem:[%s1 + $0x120] sm:$0xff]
    %v86 = vld [vmem:[%s1 + $0x128] sm:$0xff]
    %v87 = vld [vmem:[%s1 + $0x130] sm:$0xff]
    %v88 = vld [vmem:[%s1 + $0x138] sm:$0xff]
    %v89 = vld [vmem:[%s1 + $0x140] sm:$0xff]
    %v90 = vld [vmem:[%s1 + $0x148] sm:$0xff]
    %v91 = vld [vmem:[%s1 + $0x150] sm:$0xff]
    %v92 = vld [vmem:[%s1 + $0x158] sm:$0xff]
    %v93 = vld [vmem:[%s1 + $0x160] sm:$0xff]
    %v94 = vld [vmem:[%s1 + $0x168] sm:$0xff]
    %v95 = vld [vmem:[%s1 + $0x170] sm:$0xff]
    %v96 = vld [vmem:[%s1 + $0x178] sm:$0xff]
    %v97 = vld [vmem:[%s1 + $0x180] sm:$0xff]
    %v98 = vld [vmem:[%s1 + $0x188] sm:$0xff]
    %v99 = vld [vmem:[%s1 + $0x190] sm:$0xff]
    %v100 = vld [vmem:[%s1 + $0x198] sm:$0xff]
    %v101 = vld [vmem:[%s1 + $0x1a0] sm:$0xff]
    %v102 = vld [vmem:[%s1 + $0x1a8] sm:$0xff]
    %v103 = vld [vmem:[%s1 + $0x1b0] sm:$0xff]
    %v104 = vld [vmem:[%s1 + $0x1b8] sm:$0xff]
    %v105 = vld [vmem:[%s1 + $0x1c0] sm:$0xff]
    %v106 = vld [vmem:[%s1 + $0x1c8] sm:$0xff]
    %v107 = vld [vmem:[%s1 + $0x1d0] sm:$0xff]
    %v108 = vld [vmem:[%s1 + $0x1d8] sm:$0xff]
    %v109 = vld [vmem:[%s1 + $0x1e0] sm:$0xff]
    %v110 = vld [vmem:[%s1 + $0x1e8] sm:$0xff]
    %v111 = vld [vmem:[%s1 + $0x1f0] sm:$0xff]
    %v112 = vld [vmem:[%s1 + $0x1f8] sm:$0xff]
    %113 = vmatprep.subr.mxu0 0.0
    %v114 = vand.u32 %v49, 4294901760
    %115 = vmatpush1.msra.mxu0 %v114
    %116 = vmatprep.subr.mxu0 0.0
    %v117 = vand.u32 %v50, 4294901760
    %118 = vmatpush1.msra.mxu0 %v117
    %119 = vmatprep.subr.mxu0 0.0
    %v120 = vand.u32 %v51, 4294901760
    %121 = vmatpush1.msra.mxu0 %v120
    %122 = vmatprep.subr.mxu0 0.0
    %v123 = vand.u32 %v52, 4294901760
    %124 = vmatpush1.msra.mxu0 %v123
    %125 = vmatprep.subr.mxu0 0.0
    %v126 = vand.u32 %v53, 4294901760
    %127 = vmatpush1.msra.mxu0 %v126
    %128 = vmatprep.subr.mxu0 0.0
    %v129 = vand.u32 %v54, 4294901760
    %130 = vmatpush1.msra.mxu0 %v129
    %131 = vmatprep.subr.mxu0 0.0
    %v132 = vand.u32 %v55, 4294901760
    %133 = vmatpush1.msra.mxu0 %v132
    %134 = vmatprep.subr.mxu0 0.0
    %v135 = vand.u32 %v56, 4294901760
    %136 = vmatpush1.msra.mxu0 %v135
    %137 = vmatprep.subr.mxu0 0.0
    %v138 = vand.u32 %v57, 4294901760
    %139 = vmatpush1.msra.mxu0 %v138
    %140 = vmatprep.subr.mxu0 0.0
    %v141 = vand.u32 %v58, 4294901760
    %142 = vmatpush1.msra.mxu0 %v141
    %143 = vmatprep.subr.mxu0 0.0
    %v144 = vand.u32 %v59, 4294901760
    %145 = vmatpush1.msra.mxu0 %v144
    %146 = vmatprep.subr.mxu0 0.0
    %v147 = vand.u32 %v60, 4294901760
    %148 = vmatpush1.msra.mxu0 %v147
    %149 = vmatprep.subr.mxu0 0.0
    %v150 = vand.u32 %v61, 4294901760
    %151 = vmatpush1.msra.mxu0 %v150
    %152 = vmatprep.subr.mxu0 0.0
    %v153 = vand.u32 %v62, 4294901760
    %154 = vmatpush1.msra.mxu0 %v153
    %155 = vmatprep.subr.mxu0 0.0
    %v156 = vand.u32 %v63, 4294901760
    %157 = vmatpush1.msra.mxu0 %v156
    %158 = vmatprep.subr.mxu0 0.0
    %v159 = vand.u32 %v64, 4294901760
    %160 = vmatpush1.msra.mxu0 %v159
    %161 = vmatprep.subr.mxu0 0.0
    %v162 = vand.u32 %v65, 4294901760
    %163 = vmatpush1.msra.mxu0 %v162
    %164 = vmatprep.subr.mxu0 0.0
    %v165 = vand.u32 %v66, 4294901760
    %166 = vmatpush1.msra.mxu0 %v165
    %167 = vmatprep.subr.mxu0 0.0
    %v168 = vand.u32 %v67, 4294901760
    %169 = vmatpush1.msra.mxu0 %v168
    %170 = vmatprep.subr.mxu0 0.0
    %v171 = vand.u32 %v68, 4294901760
    %172 = vmatpush1.msra.mxu0 %v171
    %173 = vmatprep.subr.mxu0 0.0
    %v174 = vand.u32 %v69, 4294901760
    %175 = vmatpush1.msra.mxu0 %v174
    %176 = vmatprep.subr.mxu0 0.0
    %v177 = vand.u32 %v70, 4294901760
    %178 = vmatpush1.msra.mxu0 %v177
    %179 = vmatprep.subr.mxu0 0.0
    %v180 = vand.u32 %v71, 4294901760
    %181 = vmatpush1.msra.mxu0 %v180
    %182 = vmatprep.subr.mxu0 0.0
    %v183 = vand.u32 %v72, 4294901760
    %184 = vmatpush1.msra.mxu0 %v183
    %185 = vmatprep.subr.mxu0 0.0
    %v186 = vand.u32 %v73, 4294901760
    %187 = vmatpush1.msra.mxu0 %v186
    %188 = vmatprep.subr.mxu0 0.0
    %v189 = vand.u32 %v74, 4294901760
    %190 = vmatpush1.msra.mxu0 %v189
    %191 = vmatprep.subr.mxu0 0.0
    %v192 = vand.u32 %v75, 4294901760
    %193 = vmatpush1.msra.mxu0 %v192
    %194 = vmatprep.subr.mxu0 0.0
    %v195 = vand.u32 %v76, 4294901760
    %196 = vmatpush1.msra.mxu0 %v195
    %197 = vmatprep.subr.mxu0 0.0
    %v198 = vand.u32 %v77, 4294901760
    %199 = vmatpush1.msra.mxu0 %v198
    %200 = vmatprep.subr.mxu0 0.0
    %v201 = vand.u32 %v78, 4294901760
    %202 = vmatpush1.msra.mxu0 %v201
    %203 = vmatprep.subr.mxu0 0.0
    %v204 = vand.u32 %v79, 4294901760
    %205 = vmatpush1.msra.mxu0 %v204
    %206 = vmatprep.subr.mxu0 0.0
    %v207 = vand.u32 %v80, 4294901760
    %208 = vmatpush1.msra.mxu0 %v207
    %v209 = vand.u32 %v42, 4294901760
    %v210 = vsub.f32 %v42, %v209
    %v211 = vand.u32 %v210, 4294901760
    %v212 = vsub.f32 %v210, %v211
    %v213 = vand.u32 %v212, 4294901760
    %214 = vmatprep.mubr.f32.mxu0 %v213
    %v215 = vand.u32 %v41, 4294901760
    %v216 = vsub.f32 %v41, %v215
    %v217 = vand.u32 %v216, 4294901760
    %v218 = vsub.f32 %v216, %v217
    %v219 = vand.u32 %v218, 4294901760
    %220 = vmatmul.mubr.f32.gmra.mrb[0].mxu0 %v219
    %v221 = vpop.f32.mrb[0].mxu0
    %v222 = vadd.f32 0.0, %v221
    %v223 = vpop.f32.mrb[0].mxu0
    %v224 = vand.u32 %v46, 4294901760
    %v225 = vsub.f32 %v46, %v224
    %v226 = vand.u32 %v225, 4294901760
    %v227 = vsub.f32 %v225, %v226
    %v228 = vand.u32 %v227, 4294901760
    %229 = vmatprep.mubr.f32.mxu0 %v228
    %v230 = vand.u32 %v45, 4294901760
    %v231 = vsub.f32 %v45, %v230
    %v232 = vand.u32 %v231, 4294901760
    %v233 = vsub.f32 %v231, %v232
    %v234 = vand.u32 %v233, 4294901760
    %235 = vmatmul.mubr.f32.gmra.mrb[0].mxu0 %v234
    %v236 = vpop.f32.mrb[0].mxu0
    %v237 = vadd.f32 0.0, %v236
    %v238 = vpop.f32.mrb[0].mxu0
    %239 = vdwg.mxu0
    %240 = vmatprep.subr.mxu0 0.0
    %v241 = vand.u32 %v49, 4294901760
    %v242 = vsub.f32 %v49, %v241
    %v243 = vand.u32 %v242, 4294901760
    %v244 = vsub.f32 %v242, %v243
    %v245 = vand.u32 %v244, 4294901760
    %246 = vmatpush1.msra.mxu0 %v245
    %247 = vmatprep.subr.mxu0 0.0
    %v248 = vand.u32 %v50, 4294901760
    %v249 = vsub.f32 %v50, %v248
    %v250 = vand.u32 %v249, 4294901760
    %v251 = vsub.f32 %v249, %v250
    %v252 = vand.u32 %v251, 4294901760
    %253 = vmatpush1.msra.mxu0 %v252
    %254 = vmatprep.subr.mxu0 0.0
    %v255 = vand.u32 %v51, 4294901760
    %v256 = vsub.f32 %v51, %v255
    %v257 = vand.u32 %v256, 4294901760
    %v258 = vsub.f32 %v256, %v257
    %v259 = vand.u32 %v258, 4294901760
    %260 = vmatpush1.msra.mxu0 %v259
    %261 = vmatprep.subr.mxu0 0.0
    %v262 = vand.u32 %v52, 4294901760
    %v263 = vsub.f32 %v52, %v262
    %v264 = vand.u32 %v263, 4294901760
    %v265 = vsub.f32 %v263, %v264
    %v266 = vand.u32 %v265, 4294901760
    %267 = vmatpush1.msra.mxu0 %v266
    %268 = vmatprep.subr.mxu0 0.0
    %v269 = vand.u32 %v53, 4294901760
    %v270 = vsub.f32 %v53, %v269
    %v271 = vand.u32 %v270, 4294901760
    %v272 = vsub.f32 %v270, %v271
    %v273 = vand.u32 %v272, 4294901760
    %274 = vmatpush1.msra.mxu0 %v273
    %275 = vmatprep.subr.mxu0 0.0
    %v276 = vand.u32 %v54, 4294901760
    %v277 = vsub.f32 %v54, %v276
    %v278 = vand.u32 %v277, 4294901760
    %v279 = vsub.f32 %v277, %v278
    %v280 = vand.u32 %v279, 4294901760
    %281 = vmatpush1.msra.mxu0 %v280
    %282 = vmatprep.subr.mxu0 0.0
    %v283 = vand.u32 %v55, 4294901760
    %v284 = vsub.f32 %v55, %v283
    %v285 = vand.u32 %v284, 4294901760
    %v286 = vsub.f32 %v284, %v285
    %v287 = vand.u32 %v286, 4294901760
    %288 = vmatpush1.msra.mxu0 %v287
    %289 = vmatprep.subr.mxu0 0.0
    %v290 = vand.u32 %v56, 4294901760
    %v291 = vsub.f32 %v56, %v290
    %v292 = vand.u32 %v291, 4294901760
    %v293 = vsub.f32 %v291, %v292
    %v294 = vand.u32 %v293, 4294901760
    %295 = vmatpush1.msra.mxu0 %v294
    %296 = vmatprep.subr.mxu0 0.0
    %v297 = vand.u32 %v57, 4294901760
    %v298 = vsub.f32 %v57, %v297
    %v299 = vand.u32 %v298, 4294901760
    %v300 = vsub.f32 %v298, %v299
    %v301 = vand.u32 %v300, 4294901760
    %302 = vmatpush1.msra.mxu0 %v301
    %303 = vmatprep.subr.mxu0 0.0
    %v304 = vand.u32 %v58, 4294901760
    %v305 = vsub.f32 %v58, %v304
    %v306 = vand.u32 %v305, 4294901760
    %v307 = vsub.f32 %v305, %v306
    %v308 = vand.u32 %v307, 4294901760
    %309 = vmatpush1.msra.mxu0 %v308
    %310 = vmatprep.subr.mxu0 0.0
    %v311 = vand.u32 %v59, 4294901760
    %v312 = vsub.f32 %v59, %v311
    %v313 = vand.u32 %v312, 4294901760
    %v314 = vsub.f32 %v312, %v313
    %v315 = vand.u32 %v314, 4294901760
    %316 = vmatpush1.msra.mxu0 %v315
    %317 = vmatprep.subr.mxu0 0.0
    %v318 = vand.u32 %v60, 4294901760
    %v319 = vsub.f32 %v60, %v318
    %v320 = vand.u32 %v319, 4294901760
    %v321 = vsub.f32 %v319, %v320
    %v322 = vand.u32 %v321, 4294901760
    %323 = vmatpush1.msra.mxu0 %v322
    %324 = vmatprep.subr.mxu0 0.0
    %v325 = vand.u32 %v61, 4294901760
    %v326 = vsub.f32 %v61, %v325
    %v327 = vand.u32 %v326, 4294901760
    %v328 = vsub.f32 %v326, %v327
    %v329 = vand.u32 %v328, 4294901760
    %330 = vmatpush1.msra.mxu0 %v329
    %331 = vmatprep.subr.mxu0 0.0
    %v332 = vand.u32 %v62, 4294901760
    %v333 = vsub.f32 %v62, %v332
    %v334 = vand.u32 %v333, 4294901760
    %v335 = vsub.f32 %v333, %v334
    %v336 = vand.u32 %v335, 4294901760
    %337 = vmatpush1.msra.mxu0 %v336
    %338 = vmatprep.subr.mxu0 0.0
    %v339 = vand.u32 %v63, 4294901760
    %v340 = vsub.f32 %v63, %v339
    %v341 = vand.u32 %v340, 4294901760
    %v342 = vsub.f32 %v340, %v341
    %v343 = vand.u32 %v342, 4294901760
    %344 = vmatpush1.msra.mxu0 %v343
    %345 = vmatprep.subr.mxu0 0.0
    %v346 = vand.u32 %v64, 4294901760
    %v347 = vsub.f32 %v64, %v346
    %v348 = vand.u32 %v347, 4294901760
    %v349 = vsub.f32 %v347, %v348
    %v350 = vand.u32 %v349, 4294901760
    %351 = vmatpush1.msra.mxu0 %v350
    %352 = vmatprep.subr.mxu0 0.0
    %v353 = vand.u32 %v65, 4294901760
    %v354 = vsub.f32 %v65, %v353
    %v355 = vand.u32 %v354, 4294901760
    %v356 = vsub.f32 %v354, %v355
    %v357 = vand.u32 %v356, 4294901760
    %358 = vmatpush1.msra.mxu0 %v357
    %359 = vmatprep.subr.mxu0 0.0
    %v360 = vand.u32 %v66, 4294901760
    %v361 = vsub.f32 %v66, %v360
    %v362 = vand.u32 %v361, 4294901760
    %v363 = vsub.f32 %v361, %v362
    %v364 = vand.u32 %v363, 4294901760
    %365 = vmatpush1.msra.mxu0 %v364
    %366 = vmatprep.subr.mxu0 0.0
    %v367 = vand.u32 %v67, 4294901760
    %v368 = vsub.f32 %v67, %v367
    %v369 = vand.u32 %v368, 4294901760
    %v370 = vsub.f32 %v368, %v369
    %v371 = vand.u32 %v370, 4294901760
    %372 = vmatpush1.msra.mxu0 %v371
    %373 = vmatprep.subr.mxu0 0.0
    %v374 = vand.u32 %v68, 4294901760
    %v375 = vsub.f32 %v68, %v374
    %v376 = vand.u32 %v375, 4294901760
    %v377 = vsub.f32 %v375, %v376
    %v378 = vand.u32 %v377, 4294901760
    %379 = vmatpush1.msra.mxu0 %v378
    %380 = vmatprep.subr.mxu0 0.0
    %v381 = vand.u32 %v69, 4294901760
    %v382 = vsub.f32 %v69, %v381
    %v383 = vand.u32 %v382, 4294901760
    %v384 = vsub.f32 %v382, %v383
    %v385 = vand.u32 %v384, 4294901760
    %386 = vmatpush1.msra.mxu0 %v385
    %387 = vmatprep.subr.mxu0 0.0
    %v388 = vand.u32 %v70, 4294901760
    %v389 = vsub.f32 %v70, %v388
    %v390 = vand.u32 %v389, 4294901760
    %v391 = vsub.f32 %v389, %v390
    %v392 = vand.u32 %v391, 4294901760
    %393 = vmatpush1.msra.mxu0 %v392
    %394 = vmatprep.subr.mxu0 0.0
    %v395 = vand.u32 %v71, 4294901760
    %v396 = vsub.f32 %v71, %v395
    %v397 = vand.u32 %v396, 4294901760
    %v398 = vsub.f32 %v396, %v397
    %v399 = vand.u32 %v398, 4294901760
    %400 = vmatpush1.msra.mxu0 %v399
    %401 = vmatprep.subr.mxu0 0.0
    %v402 = vand.u32 %v72, 4294901760
    %v403 = vsub.f32 %v72, %v402
    %v404 = vand.u32 %v403, 4294901760
    %v405 = vsub.f32 %v403, %v404
    %v406 = vand.u32 %v405, 4294901760
    %407 = vmatpush1.msra.mxu0 %v406
    %408 = vmatprep.subr.mxu0 0.0
    %v409 = vand.u32 %v73, 4294901760
    %v410 = vsub.f32 %v73, %v409
    %v411 = vand.u32 %v410, 4294901760
    %v412 = vsub.f32 %v410, %v411
    %v413 = vand.u32 %v412, 4294901760
    %414 = vmatpush1.msra.mxu0 %v413
    %415 = vmatprep.subr.mxu0 0.0
    %v416 = vand.u32 %v74, 4294901760
    %v417 = vsub.f32 %v74, %v416
    %v418 = vand.u32 %v417, 4294901760
    %v419 = vsub.f32 %v417, %v418
    %v420 = vand.u32 %v419, 4294901760
    %421 = vmatpush1.msra.mxu0 %v420
    %422 = vmatprep.subr.mxu0 0.0
    %v423 = vand.u32 %v75, 4294901760
    %v424 = vsub.f32 %v75, %v423
    %v425 = vand.u32 %v424, 4294901760
    %v426 = vsub.f32 %v424, %v425
    %v427 = vand.u32 %v426, 4294901760
    %428 = vmatpush1.msra.mxu0 %v427
    %429 = vmatprep.subr.mxu0 0.0
    %v430 = vand.u32 %v76, 4294901760
    %v431 = vsub.f32 %v76, %v430
    %v432 = vand.u32 %v431, 4294901760
    %v433 = vsub.f32 %v431, %v432
    %v434 = vand.u32 %v433, 4294901760
    %435 = vmatpush1.msra.mxu0 %v434
    %436 = vmatprep.subr.mxu0 0.0
    %v437 = vand.u32 %v77, 4294901760
    %v438 = vsub.f32 %v77, %v437
    %v439 = vand.u32 %v438, 4294901760
    %v440 = vsub.f32 %v438, %v439
    %v441 = vand.u32 %v440, 4294901760
    %442 = vmatpush1.msra.mxu0 %v441
    %443 = vmatprep.subr.mxu0 0.0
    %v444 = vand.u32 %v78, 4294901760
    %v445 = vsub.f32 %v78, %v444
    %v446 = vand.u32 %v445, 4294901760
    %v447 = vsub.f32 %v445, %v446
    %v448 = vand.u32 %v447, 4294901760
    %449 = vmatpush1.msra.mxu0 %v448
    %450 = vmatprep.subr.mxu0 0.0
    %v451 = vand.u32 %v79, 4294901760
    %v452 = vsub.f32 %v79, %v451
    %v453 = vand.u32 %v452, 4294901760
    %v454 = vsub.f32 %v452, %v453
    %v455 = vand.u32 %v454, 4294901760
    %456 = vmatpush1.msra.mxu0 %v455
    %457 = vmatprep.subr.mxu0 0.0
    %v458 = vand.u32 %v80, 4294901760
    %v459 = vsub.f32 %v80, %v458
    %v460 = vand.u32 %v459, 4294901760
    %v461 = vsub.f32 %v459, %v460
    %v462 = vand.u32 %v461, 4294901760
    %463 = vmatpush1.msra.mxu0 %v462
    %v464 = vand.u32 %v42, 4294901760
    %465 = vmatprep.mubr.f32.mxu0 %v464
    %v466 = vand.u32 %v41, 4294901760
    %467 = vmatmul.mubr.f32.gmra.mrb[0].mxu0 %v466
    %v468 = vpop.f32.mrb[0].mxu0
    %v469 = vadd.f32 %v222, %v468
    %v470 = vpop.f32.mrb[0].mxu0
    %v471 = vand.u32 %v46, 4294901760
    %472 = vmatprep.mubr.f32.mxu0 %v471
    %v473 = vand.u32 %v45, 4294901760
    %474 = vmatmul.mubr.f32.gmra.mrb[0].mxu0 %v473
    %v475 = vpop.f32.mrb[0].mxu0
    %v476 = vadd.f32 %v237, %v475
    %v477 = vpop.f32.mrb[0].mxu0
    %478 = vdwg.mxu0
    %479 = vmatprep.subr.mxu0 0.0
    %v480 = vand.u32 %v49, 4294901760
    %v481 = vsub.f32 %v49, %v480
    %482 = vmatpush1.msra.mxu0 %v481
    %483 = vmatprep.subr.mxu0 0.0
    %v484 = vand.u32 %v50, 4294901760
    %v485 = vsub.f32 %v50, %v484
    %486 = vmatpush1.msra.mxu0 %v485
    %487 = vmatprep.subr.mxu0 0.0
    %v488 = vand.u32 %v51, 4294901760
    %v489 = vsub.f32 %v51, %v488
    %490 = vmatpush1.msra.mxu0 %v489
    %491 = vmatprep.subr.mxu0 0.0
    %v492 = vand.u32 %v52, 4294901760
    %v493 = vsub.f32 %v52, %v492
    %494 = vmatpush1.msra.mxu0 %v493
    %495 = vmatprep.subr.mxu0 0.0
    %v496 = vand.u32 %v53, 4294901760
    %v497 = vsub.f32 %v53, %v496
    %498 = vmatpush1.msra.mxu0 %v497
    %499 = vmatprep.subr.mxu0 0.0
    %v500 = vand.u32 %v54, 4294901760
    %v501 = vsub.f32 %v54, %v500
    %502 = vmatpush1.msra.mxu0 %v501
    %503 = vmatprep.subr.mxu0 0.0
    %v504 = vand.u32 %v55, 4294901760
    %v505 = vsub.f32 %v55, %v504
    %506 = vmatpush1.msra.mxu0 %v505
    %507 = vmatprep.subr.mxu0 0.0
    %v508 = vand.u32 %v56, 4294901760
    %v509 = vsub.f32 %v56, %v508
    %510 = vmatpush1.msra.mxu0 %v509
    %511 = vmatprep.subr.mxu0 0.0
    %v512 = vand.u32 %v57, 4294901760
    %v513 = vsub.f32 %v57, %v512
    %514 = vmatpush1.msra.mxu0 %v513
    %515 = vmatprep.subr.mxu0 0.0
    %v516 = vand.u32 %v58, 4294901760
    %v517 = vsub.f32 %v58, %v516
    %518 = vmatpush1.msra.mxu0 %v517
    %519 = vmatprep.subr.mxu0 0.0
    %v520 = vand.u32 %v59, 4294901760
    %v521 = vsub.f32 %v59, %v520
    %522 = vmatpush1.msra.mxu0 %v521
    %523 = vmatprep.subr.mxu0 0.0
    %v524 = vand.u32 %v60, 4294901760
    %v525 = vsub.f32 %v60, %v524
    %526 = vmatpush1.msra.mxu0 %v525
    %527 = vmatprep.subr.mxu0 0.0
    %v528 = vand.u32 %v61, 4294901760
    %v529 = vsub.f32 %v61, %v528
    %530 = vmatpush1.msra.mxu0 %v529
    %531 = vmatprep.subr.mxu0 0.0
    %v532 = vand.u32 %v62, 4294901760
    %v533 = vsub.f32 %v62, %v532
    %534 = vmatpush1.msra.mxu0 %v533
    %535 = vmatprep.subr.mxu0 0.0
    %v536 = vand.u32 %v63, 4294901760
    %v537 = vsub.f32 %v63, %v536
    %538 = vmatpush1.msra.mxu0 %v537
    %539 = vmatprep.subr.mxu0 0.0
    %v540 = vand.u32 %v64, 4294901760
    %v541 = vsub.f32 %v64, %v540
    %542 = vmatpush1.msra.mxu0 %v541
    %543 = vmatprep.subr.mxu0 0.0
    %v544 = vand.u32 %v65, 4294901760
    %v545 = vsub.f32 %v65, %v544
    %546 = vmatpush1.msra.mxu0 %v545
    %547 = vmatprep.subr.mxu0 0.0
    %v548 = vand.u32 %v66, 4294901760
    %v549 = vsub.f32 %v66, %v548
    %550 = vmatpush1.msra.mxu0 %v549
    %551 = vmatprep.subr.mxu0 0.0
    %v552 = vand.u32 %v67, 4294901760
    %v553 = vsub.f32 %v67, %v552
    %554 = vmatpush1.msra.mxu0 %v553
    %555 = vmatprep.subr.mxu0 0.0
    %v556 = vand.u32 %v68, 4294901760
    %v557 = vsub.f32 %v68, %v556
    %558 = vmatpush1.msra.mxu0 %v557
    %559 = vmatprep.subr.mxu0 0.0
    %v560 = vand.u32 %v69, 4294901760
    %v561 = vsub.f32 %v69, %v560
    %562 = vmatpush1.msra.mxu0 %v561
    %563 = vmatprep.subr.mxu0 0.0
    %v564 = vand.u32 %v70, 4294901760
    %v565 = vsub.f32 %v70, %v564
    %566 = vmatpush1.msra.mxu0 %v565
    %567 = vmatprep.subr.mxu0 0.0
    %v568 = vand.u32 %v71, 4294901760
    %v569 = vsub.f32 %v71, %v568
    %570 = vmatpush1.msra.mxu0 %v569
    %571 = vmatprep.subr.mxu0 0.0
    %v572 = vand.u32 %v72, 4294901760
    %v573 = vsub.f32 %v72, %v572
    %574 = vmatpush1.msra.mxu0 %v573
    %575 = vmatprep.subr.mxu0 0.0
    %v576 = vand.u32 %v73, 4294901760
    %v577 = vsub.f32 %v73, %v576
    %578 = vmatpush1.msra.mxu0 %v577
    %579 = vmatprep.subr.mxu0 0.0
    %v580 = vand.u32 %v74, 4294901760
    %v581 = vsub.f32 %v74, %v580
    %582 = vmatpush1.msra.mxu0 %v581
    %583 = vmatprep.subr.mxu0 0.0
    %v584 = vand.u32 %v75, 4294901760
    %v585 = vsub.f32 %v75, %v584
    %586 = vmatpush1.msra.mxu0 %v585
    %587 = vmatprep.subr.mxu0 0.0
    %v588 = vand.u32 %v76, 4294901760
    %v589 = vsub.f32 %v76, %v588
    %590 = vmatpush1.msra.mxu0 %v589
    %591 = vmatprep.subr.mxu0 0.0
    %v592 = vand.u32 %v77, 4294901760
    %v593 = vsub.f32 %v77, %v592
    %594 = vmatpush1.msra.mxu0 %v593
    %595 = vmatprep.subr.mxu0 0.0
    %v596 = vand.u32 %v78, 4294901760
    %v597 = vsub.f32 %v78, %v596
    %598 = vmatpush1.msra.mxu0 %v597
    %599 = vmatprep.subr.mxu0 0.0
    %v600 = vand.u32 %v79, 4294901760
    %v601 = vsub.f32 %v79, %v600
    %602 = vmatpush1.msra.mxu0 %v601
    %603 = vmatprep.subr.mxu0 0.0
    %v604 = vand.u32 %v80, 4294901760
    %v605 = vsub.f32 %v80, %v604
    %606 = vmatpush1.msra.mxu0 %v605
    %v607 = vand.u32 %v42, 4294901760
    %v608 = vsub.f32 %v42, %v607
    %609 = vmatprep.mubr.f32.mxu0 %v608
    %v610 = vand.u32 %v41, 4294901760
    %v611 = vsub.f32 %v41, %v610
    %612 = vmatmul.mubr.f32.gmra.mrb[0].mxu0 %v611
    %v613 = vpop.f32.mrb[0].mxu0
    %v614 = vadd.f32 %v469, %v613
    %v615 = vpop.f32.mrb[0].mxu0
    %v616 = vand.u32 %v46, 4294901760
    %v617 = vsub.f32 %v46, %v616
    %618 = vmatprep.mubr.f32.mxu0 %v617
    %v619 = vand.u32 %v45, 4294901760
    %v620 = vsub.f32 %v45, %v619
    %621 = vmatmul.mubr.f32.gmra.mrb[0].mxu0 %v620
    %v622 = vpop.f32.mrb[0].mxu0
    %v623 = vadd.f32 %v476, %v622
    %v624 = vpop.f32.mrb[0].mxu0
    %625 = vdwg.mxu0
    %626 = vmatprep.subr.mxu0 0.0
    %v627 = vand.u32 %v49, 4294901760
    %628 = vmatpush1.msra.mxu0 %v627
    %629 = vmatprep.subr.mxu0 0.0
    %v630 = vand.u32 %v50, 4294901760
    %631 = vmatpush1.msra.mxu0 %v630
    %632 = vmatprep.subr.mxu0 0.0
    %v633 = vand.u32 %v51, 4294901760
    %634 = vmatpush1.msra.mxu0 %v633
    %635 = vmatprep.subr.mxu0 0.0
    %v636 = vand.u32 %v52, 4294901760
    %637 = vmatpush1.msra.mxu0 %v636
    %638 = vmatprep.subr.mxu0 0.0
    %v639 = vand.u32 %v53, 4294901760
    %640 = vmatpush1.msra.mxu0 %v639
    %641 = vmatprep.subr.mxu0 0.0
    %v642 = vand.u32 %v54, 4294901760
    %643 = vmatpush1.msra.mxu0 %v642
    %644 = vmatprep.subr.mxu0 0.0
    %v645 = vand.u32 %v55, 4294901760
    %646 = vmatpush1.msra.mxu0 %v645
    %647 = vmatprep.subr.mxu0 0.0
    %v648 = vand.u32 %v56, 4294901760
    %649 = vmatpush1.msra.mxu0 %v648
    %650 = vmatprep.subr.mxu0 0.0
    %v651 = vand.u32 %v57, 4294901760
    %652 = vmatpush1.msra.mxu0 %v651
    %653 = vmatprep.subr.mxu0 0.0
    %v654 = vand.u32 %v58, 4294901760
    %655 = vmatpush1.msra.mxu0 %v654
    %656 = vmatprep.subr.mxu0 0.0
    %v657 = vand.u32 %v59, 4294901760
    %658 = vmatpush1.msra.mxu0 %v657
    %659 = vmatprep.subr.mxu0 0.0
    %v660 = vand.u32 %v60, 4294901760
    %661 = vmatpush1.msra.mxu0 %v660
    %662 = vmatprep.subr.mxu0 0.0
    %v663 = vand.u32 %v61, 4294901760
    %664 = vmatpush1.msra.mxu0 %v663
    %665 = vmatprep.subr.mxu0 0.0
    %v666 = vand.u32 %v62, 4294901760
    %667 = vmatpush1.msra.mxu0 %v666
    %668 = vmatprep.subr.mxu0 0.0
    %v669 = vand.u32 %v63, 4294901760
    %670 = vmatpush1.msra.mxu0 %v669
    %671 = vmatprep.subr.mxu0 0.0
    %v672 = vand.u32 %v64, 4294901760
    %673 = vmatpush1.msra.mxu0 %v672
    %674 = vmatprep.subr.mxu0 0.0
    %v675 = vand.u32 %v65, 4294901760
    %676 = vmatpush1.msra.mxu0 %v675
    %677 = vmatprep.subr.mxu0 0.0
    %v678 = vand.u32 %v66, 4294901760
    %679 = vmatpush1.msra.mxu0 %v678
    %680 = vmatprep.subr.mxu0 0.0
    %v681 = vand.u32 %v67, 4294901760
    %682 = vmatpush1.msra.mxu0 %v681
    %683 = vmatprep.subr.mxu0 0.0
    %v684 = vand.u32 %v68, 4294901760
    %685 = vmatpush1.msra.mxu0 %v684
    %686 = vmatprep.subr.mxu0 0.0
    %v687 = vand.u32 %v69, 4294901760
    %688 = vmatpush1.msra.mxu0 %v687
    %689 = vmatprep.subr.mxu0 0.0
    %v690 = vand.u32 %v70, 4294901760
    %691 = vmatpush1.msra.mxu0 %v690
    %692 = vmatprep.subr.mxu0 0.0
    %v693 = vand.u32 %v71, 4294901760
    %694 = vmatpush1.msra.mxu0 %v693
    %695 = vmatprep.subr.mxu0 0.0
    %v696 = vand.u32 %v72, 4294901760
    %697 = vmatpush1.msra.mxu0 %v696
    %698 = vmatprep.subr.mxu0 0.0
    %v699 = vand.u32 %v73, 4294901760
    %700 = vmatpush1.msra.mxu0 %v699
    %701 = vmatprep.subr.mxu0 0.0
    %v702 = vand.u32 %v74, 4294901760
    %703 = vmatpush1.msra.mxu0 %v702
    %704 = vmatprep.subr.mxu0 0.0
    %v705 = vand.u32 %v75, 4294901760
    %706 = vmatpush1.msra.mxu0 %v705
    %707 = vmatprep.subr.mxu0 0.0
    %v708 = vand.u32 %v76, 4294901760
    %709 = vmatpush1.msra.mxu0 %v708
    %710 = vmatprep.subr.mxu0 0.0
    %v711 = vand.u32 %v77, 4294901760
    %712 = vmatpush1.msra.mxu0 %v711
    %713 = vmatprep.subr.mxu0 0.0
    %v714 = vand.u32 %v78, 4294901760
    %715 = vmatpush1.msra.mxu0 %v714
    %716 = vmatprep.subr.mxu0 0.0
    %v717 = vand.u32 %v79, 4294901760
    %718 = vmatpush1.msra.mxu0 %v717
    %719 = vmatprep.subr.mxu0 0.0
    %v720 = vand.u32 %v80, 4294901760
    %721 = vmatpush1.msra.mxu0 %v720
    %v722 = vand.u32 %v42, 4294901760
    %v723 = vsub.f32 %v42, %v722
    %v724 = vand.u32 %v723, 4294901760
    %725 = vmatprep.mubr.f32.mxu0 %v724
    %v726 = vand.u32 %v41, 4294901760
    %v727 = vsub.f32 %v41, %v726
    %v728 = vand.u32 %v727, 4294901760
    %729 = vmatmul.mubr.f32.gmra.mrb[0].mxu0 %v728
    %v730 = vpop.f32.mrb[0].mxu0
    %v731 = vadd.f32 %v614, %v730
    %v732 = vpop.f32.mrb[0].mxu0
    %v733 = vand.u32 %v46, 4294901760
    %v734 = vsub.f32 %v46, %v733
    %v735 = vand.u32 %v734, 4294901760
    %736 = vmatprep.mubr.f32.mxu0 %v735
    %v737 = vand.u32 %v45, 4294901760
    %v738 = vsub.f32 %v45, %v737
    %v739 = vand.u32 %v738, 4294901760
    %740 = vmatmul.mubr.f32.gmra.mrb[0].mxu0 %v739
    %v741 = vpop.f32.mrb[0].mxu0
    %v742 = vadd.f32 %v623, %v741
    %v743 = vpop.f32.mrb[0].mxu0
    %744 = vdwg.mxu0
    %745 = vmatprep.subr.mxu0 0.0
    %v746 = vand.u32 %v49, 4294901760
    %v747 = vsub.f32 %v49, %v746
    %v748 = vand.u32 %v747, 4294901760
    %749 = vmatpush1.msra.mxu0 %v748
    %750 = vmatprep.subr.mxu0 0.0
    %v751 = vand.u32 %v50, 4294901760
    %v752 = vsub.f32 %v50, %v751
    %v753 = vand.u32 %v752, 4294901760
    %754 = vmatpush1.msra.mxu0 %v753
    %755 = vmatprep.subr.mxu0 0.0
    %v756 = vand.u32 %v51, 4294901760
    %v757 = vsub.f32 %v51, %v756
    %v758 = vand.u32 %v757, 4294901760
    %759 = vmatpush1.msra.mxu0 %v758
    %760 = vmatprep.subr.mxu0 0.0
    %v761 = vand.u32 %v52, 4294901760
    %v762 = vsub.f32 %v52, %v761
    %v763 = vand.u32 %v762, 4294901760
    %764 = vmatpush1.msra.mxu0 %v763
    %765 = vmatprep.subr.mxu0 0.0
    %v766 = vand.u32 %v53, 4294901760
    %v767 = vsub.f32 %v53, %v766
    %v768 = vand.u32 %v767, 4294901760
    %769 = vmatpush1.msra.mxu0 %v768
    %770 = vmatprep.subr.mxu0 0.0
    %v771 = vand.u32 %v54, 4294901760
    %v772 = vsub.f32 %v54, %v771
    %v773 = vand.u32 %v772, 4294901760
    %774 = vmatpush1.msra.mxu0 %v773
    %775 = vmatprep.subr.mxu0 0.0
    %v776 = vand.u32 %v55, 4294901760
    %v777 = vsub.f32 %v55, %v776
    %v778 = vand.u32 %v777, 4294901760
    %779 = vmatpush1.msra.mxu0 %v778
    %780 = vmatprep.subr.mxu0 0.0
    %v781 = vand.u32 %v56, 4294901760
    %v782 = vsub.f32 %v56, %v781
    %v783 = vand.u32 %v782, 4294901760
    %784 = vmatpush1.msra.mxu0 %v783
    %785 = vmatprep.subr.mxu0 0.0
    %v786 = vand.u32 %v57, 4294901760
    %v787 = vsub.f32 %v57, %v786
    %v788 = vand.u32 %v787, 4294901760
    %789 = vmatpush1.msra.mxu0 %v788
    %790 = vmatprep.subr.mxu0 0.0
    %v791 = vand.u32 %v58, 4294901760
    %v792 = vsub.f32 %v58, %v791
    %v793 = vand.u32 %v792, 4294901760
    %794 = vmatpush1.msra.mxu0 %v793
    %795 = vmatprep.subr.mxu0 0.0
    %v796 = vand.u32 %v59, 4294901760
    %v797 = vsub.f32 %v59, %v796
    %v798 = vand.u32 %v797, 4294901760
    %799 = vmatpush1.msra.mxu0 %v798
    %800 = vmatprep.subr.mxu0 0.0
    %v801 = vand.u32 %v60, 4294901760
    %v802 = vsub.f32 %v60, %v801
    %v803 = vand.u32 %v802, 4294901760
    %804 = vmatpush1.msra.mxu0 %v803
    %805 = vmatprep.subr.mxu0 0.0
    %v806 = vand.u32 %v61, 4294901760
    %v807 = vsub.f32 %v61, %v806
    %v808 = vand.u32 %v807, 4294901760
    %809 = vmatpush1.msra.mxu0 %v808
    %810 = vmatprep.subr.mxu0 0.0
    %v811 = vand.u32 %v62, 4294901760
    %v812 = vsub.f32 %v62, %v811
    %v813 = vand.u32 %v812, 4294901760
    %814 = vmatpush1.msra.mxu0 %v813
    %815 = vmatprep.subr.mxu0 0.0
    %v816 = vand.u32 %v63, 4294901760
    %v817 = vsub.f32 %v63, %v816
    %v818 = vand.u32 %v817, 4294901760
    %819 = vmatpush1.msra.mxu0 %v818
    %820 = vmatprep.subr.mxu0 0.0
    %v821 = vand.u32 %v64, 4294901760
    %v822 = vsub.f32 %v64, %v821
    %v823 = vand.u32 %v822, 4294901760
    %824 = vmatpush1.msra.mxu0 %v823
    %825 = vmatprep.subr.mxu0 0.0
    %v826 = vand.u32 %v65, 4294901760
    %v827 = vsub.f32 %v65, %v826
    %v828 = vand.u32 %v827, 4294901760
    %829 = vmatpush1.msra.mxu0 %v828
    %830 = vmatprep.subr.mxu0 0.0
    %v831 = vand.u32 %v66, 4294901760
    %v832 = vsub.f32 %v66, %v831
    %v833 = vand.u32 %v832, 4294901760
    %834 = vmatpush1.msra.mxu0 %v833
    %835 = vmatprep.subr.mxu0 0.0
    %v836 = vand.u32 %v67, 4294901760
    %v837 = vsub.f32 %v67, %v836
    %v838 = vand.u32 %v837, 4294901760
    %839 = vmatpush1.msra.mxu0 %v838
    %840 = vmatprep.subr.mxu0 0.0
    %v841 = vand.u32 %v68, 4294901760
    %v842 = vsub.f32 %v68, %v841
    %v843 = vand.u32 %v842, 4294901760
    %844 = vmatpush1.msra.mxu0 %v843
    %845 = vmatprep.subr.mxu0 0.0
    %v846 = vand.u32 %v69, 4294901760
    %v847 = vsub.f32 %v69, %v846
    %v848 = vand.u32 %v847, 4294901760
    %849 = vmatpush1.msra.mxu0 %v848
    %850 = vmatprep.subr.mxu0 0.0
    %v851 = vand.u32 %v70, 4294901760
    %v852 = vsub.f32 %v70, %v851
    %v853 = vand.u32 %v852, 4294901760
    %854 = vmatpush1.msra.mxu0 %v853
    %855 = vmatprep.subr.mxu0 0.0
    %v856 = vand.u32 %v71, 4294901760
    %v857 = vsub.f32 %v71, %v856
    %v858 = vand.u32 %v857, 4294901760
    %859 = vmatpush1.msra.mxu0 %v858
    %860 = vmatprep.subr.mxu0 0.0
    %v861 = vand.u32 %v72, 4294901760
    %v862 = vsub.f32 %v72, %v861
    %v863 = vand.u32 %v862, 4294901760
    %864 = vmatpush1.msra.mxu0 %v863
    %865 = vmatprep.subr.mxu0 0.0
    %v866 = vand.u32 %v73, 4294901760
    %v867 = vsub.f32 %v73, %v866
    %v868 = vand.u32 %v867, 4294901760
    %869 = vmatpush1.msra.mxu0 %v868
    %870 = vmatprep.subr.mxu0 0.0
    %v871 = vand.u32 %v74, 4294901760
    %v872 = vsub.f32 %v74, %v871
    %v873 = vand.u32 %v872, 4294901760
    %874 = vmatpush1.msra.mxu0 %v873
    %875 = vmatprep.subr.mxu0 0.0
    %v876 = vand.u32 %v75, 4294901760
    %v877 = vsub.f32 %v75, %v876
    %v878 = vand.u32 %v877, 4294901760
    %879 = vmatpush1.msra.mxu0 %v878
    %880 = vmatprep.subr.mxu0 0.0
    %v881 = vand.u32 %v76, 4294901760
    %v882 = vsub.f32 %v76, %v881
    %v883 = vand.u32 %v882, 4294901760
    %884 = vmatpush1.msra.mxu0 %v883
    %885 = vmatprep.subr.mxu0 0.0
    %v886 = vand.u32 %v77, 4294901760
    %v887 = vsub.f32 %v77, %v886
    %v888 = vand.u32 %v887, 4294901760
    %889 = vmatpush1.msra.mxu0 %v888
    %890 = vmatprep.subr.mxu0 0.0
    %v891 = vand.u32 %v78, 4294901760
    %v892 = vsub.f32 %v78, %v891
    %v893 = vand.u32 %v892, 4294901760
    %894 = vmatpush1.msra.mxu0 %v893
    %895 = vmatprep.subr.mxu0 0.0
    %v896 = vand.u32 %v79, 4294901760
    %v897 = vsub.f32 %v79, %v896
    %v898 = vand.u32 %v897, 4294901760
    %899 = vmatpush1.msra.mxu0 %v898
    %900 = vmatprep.subr.mxu0 0.0
    %v901 = vand.u32 %v80, 4294901760
    %v902 = vsub.f32 %v80, %v901
    %v903 = vand.u32 %v902, 4294901760
    %904 = vmatpush1.msra.mxu0 %v903
    %v905 = vand.u32 %v42, 4294901760
    %906 = vmatprep.mubr.f32.mxu0 %v905
    %v907 = vand.u32 %v41, 4294901760
    %908 = vmatmul.mubr.f32.gmra.mrb[0].mxu0 %v907
    %v909 = vpop.f32.mrb[0].mxu0
    %v910 = vadd.f32 %v731, %v909
    %v911 = vpop.f32.mrb[0].mxu0
    %v912 = vand.u32 %v46, 4294901760
    %913 = vmatprep.mubr.f32.mxu0 %v912
    %v914 = vand.u32 %v45, 4294901760
    %915 = vmatmul.mubr.f32.gmra.mrb[0].mxu0 %v914
    %v916 = vpop.f32.mrb[0].mxu0
    %v917 = vadd.f32 %v742, %v916
    %v918 = vpop.f32.mrb[0].mxu0
    %919 = vdwg.mxu0
    %920 = vmatprep.subr.mxu0 0.0
    %v921 = vand.u32 %v49, 4294901760
    %922 = vmatpush1.msra.mxu0 %v921
    %923 = vmatprep.subr.mxu0 0.0
    %v924 = vand.u32 %v50, 4294901760
    %925 = vmatpush1.msra.mxu0 %v924
    %926 = vmatprep.subr.mxu0 0.0
    %v927 = vand.u32 %v51, 4294901760
    %928 = vmatpush1.msra.mxu0 %v927
    %929 = vmatprep.subr.mxu0 0.0
    %v930 = vand.u32 %v52, 4294901760
    %931 = vmatpush1.msra.mxu0 %v930
    %932 = vmatprep.subr.mxu0 0.0
    %v933 = vand.u32 %v53, 4294901760
    %934 = vmatpush1.msra.mxu0 %v933
    %935 = vmatprep.subr.mxu0 0.0
    %v936 = vand.u32 %v54, 4294901760
    %937 = vmatpush1.msra.mxu0 %v936
    %938 = vmatprep.subr.mxu0 0.0
    %v939 = vand.u32 %v55, 4294901760
    %940 = vmatpush1.msra.mxu0 %v939
    %941 = vmatprep.subr.mxu0 0.0
    %v942 = vand.u32 %v56, 4294901760
    %943 = vmatpush1.msra.mxu0 %v942
    %944 = vmatprep.subr.mxu0 0.0
    %v945 = vand.u32 %v57, 4294901760
    %946 = vmatpush1.msra.mxu0 %v945
    %947 = vmatprep.subr.mxu0 0.0
    %v948 = vand.u32 %v58, 4294901760
    %949 = vmatpush1.msra.mxu0 %v948
    %950 = vmatprep.subr.mxu0 0.0
    %v951 = vand.u32 %v59, 4294901760
    %952 = vmatpush1.msra.mxu0 %v951
    %953 = vmatprep.subr.mxu0 0.0
    %v954 = vand.u32 %v60, 4294901760
    %955 = vmatpush1.msra.mxu0 %v954
    %956 = vmatprep.subr.mxu0 0.0
    %v957 = vand.u32 %v61, 4294901760
    %958 = vmatpush1.msra.mxu0 %v957
    %959 = vmatprep.subr.mxu0 0.0
    %v960 = vand.u32 %v62, 4294901760
    %961 = vmatpush1.msra.mxu0 %v960
    %962 = vmatprep.subr.mxu0 0.0
    %v963 = vand.u32 %v63, 4294901760
    %964 = vmatpush1.msra.mxu0 %v963
    %965 = vmatprep.subr.mxu0 0.0
    %v966 = vand.u32 %v64, 4294901760
    %967 = vmatpush1.msra.mxu0 %v966
    %968 = vmatprep.subr.mxu0 0.0
    %v969 = vand.u32 %v65, 4294901760
    %970 = vmatpush1.msra.mxu0 %v969
    %971 = vmatprep.subr.mxu0 0.0
    %v972 = vand.u32 %v66, 4294901760
    %973 = vmatpush1.msra.mxu0 %v972
    %974 = vmatprep.subr.mxu0 0.0
    %v975 = vand.u32 %v67, 4294901760
    %976 = vmatpush1.msra.mxu0 %v975
    %977 = vmatprep.subr.mxu0 0.0
    %v978 = vand.u32 %v68, 4294901760
    %979 = vmatpush1.msra.mxu0 %v978
    %980 = vmatprep.subr.mxu0 0.0
    %v981 = vand.u32 %v69, 4294901760
    %982 = vmatpush1.msra.mxu0 %v981
    %983 = vmatprep.subr.mxu0 0.0
    %v984 = vand.u32 %v70, 4294901760
    %985 = vmatpush1.msra.mxu0 %v984
    %986 = vmatprep.subr.mxu0 0.0
    %v987 = vand.u32 %v71, 4294901760
    %988 = vmatpush1.msra.mxu0 %v987
    %989 = vmatprep.subr.mxu0 0.0
    %v990 = vand.u32 %v72, 4294901760
    %991 = vmatpush1.msra.mxu0 %v990
    %992 = vmatprep.subr.mxu0 0.0
    %v993 = vand.u32 %v73, 4294901760
    %994 = vmatpush1.msra.mxu0 %v993
    %995 = vmatprep.subr.mxu0 0.0
    %v996 = vand.u32 %v74, 4294901760
    %997 = vmatpush1.msra.mxu0 %v996
    %998 = vmatprep.subr.mxu0 0.0
    %v999 = vand.u32 %v75, 4294901760
    %1000 = vmatpush1.msra.mxu0 %v999
    %1001 = vmatprep.subr.mxu0 0.0
    %v1002 = vand.u32 %v76, 4294901760
    %1003 = vmatpush1.msra.mxu0 %v1002
    %1004 = vmatprep.subr.mxu0 0.0
    %v1005 = vand.u32 %v77, 4294901760
    %1006 = vmatpush1.msra.mxu0 %v1005
    %1007 = vmatprep.subr.mxu0 0.0
    %v1008 = vand.u32 %v78, 4294901760
    %1009 = vmatpush1.msra.mxu0 %v1008
    %1010 = vmatprep.subr.mxu0 0.0
    %v1011 = vand.u32 %v79, 4294901760
    %1012 = vmatpush1.msra.mxu0 %v1011
    %1013 = vmatprep.subr.mxu0 0.0
    %v1014 = vand.u32 %v80, 4294901760
    %1015 = vmatpush1.msra.mxu0 %v1014
    %v1016 = vand.u32 %v42, 4294901760
    %1017 = vmatprep.mubr.f32.mxu0 %v1016
    %v1018 = vand.u32 %v41, 4294901760
    %1019 = vmatmul.mubr.f32.gmra.mrb[0].mxu0 %v1018
    %v1020 = vpop.f32.mrb[0].mxu0
    %v1021 = vadd.f32 %v910, %v1020
    %v1022 = vpop.f32.mrb[0].mxu0
    %v1023 = vand.u32 %v46, 4294901760
    %1024 = vmatprep.mubr.f32.mxu0 %v1023
    %v1025 = vand.u32 %v45, 4294901760
    %1026 = vmatmul.mubr.f32.gmra.mrb[0].mxu0 %v1025
    %v1027 = vpop.f32.mrb[0].mxu0
    %v1028 = vadd.f32 %v917, %v1027
    %v1029 = vpop.f32.mrb[0].mxu0
    %1030 = vdwg.mxu0
    %1031 = vmatprep.subr.mxu0 0.0
    %v1032 = vand.u32 %v81, 4294901760
    %1033 = vmatpush1.msra.mxu0 %v1032
    %1034 = vmatprep.subr.mxu0 0.0
    %v1035 = vand.u32 %v82, 4294901760
    %1036 = vmatpush1.msra.mxu0 %v1035
    %1037 = vmatprep.subr.mxu0 0.0
    %v1038 = vand.u32 %v83, 4294901760
    %1039 = vmatpush1.msra.mxu0 %v1038
    %1040 = vmatprep.subr.mxu0 0.0
    %v1041 = vand.u32 %v84, 4294901760
    %1042 = vmatpush1.msra.mxu0 %v1041
    %1043 = vmatprep.subr.mxu0 0.0
    %v1044 = vand.u32 %v85, 4294901760
    %1045 = vmatpush1.msra.mxu0 %v1044
    %1046 = vmatprep.subr.mxu0 0.0
    %v1047 = vand.u32 %v86, 4294901760
    %1048 = vmatpush1.msra.mxu0 %v1047
    %1049 = vmatprep.subr.mxu0 0.0
    %v1050 = vand.u32 %v87, 4294901760
    %1051 = vmatpush1.msra.mxu0 %v1050
    %1052 = vmatprep.subr.mxu0 0.0
    %v1053 = vand.u32 %v88, 4294901760
    %1054 = vmatpush1.msra.mxu0 %v1053
    %1055 = vmatprep.subr.mxu0 0.0
    %v1056 = vand.u32 %v89, 4294901760
    %1057 = vmatpush1.msra.mxu0 %v1056
    %1058 = vmatprep.subr.mxu0 0.0
    %v1059 = vand.u32 %v90, 4294901760
    %1060 = vmatpush1.msra.mxu0 %v1059
    %1061 = vmatprep.subr.mxu0 0.0
    %v1062 = vand.u32 %v91, 4294901760
    %1063 = vmatpush1.msra.mxu0 %v1062
    %1064 = vmatprep.subr.mxu0 0.0
    %v1065 = vand.u32 %v92, 4294901760
    %1066 = vmatpush1.msra.mxu0 %v1065
    %1067 = vmatprep.subr.mxu0 0.0
    %v1068 = vand.u32 %v93, 4294901760
    %1069 = vmatpush1.msra.mxu0 %v1068
    %1070 = vmatprep.subr.mxu0 0.0
    %v1071 = vand.u32 %v94, 4294901760
    %1072 = vmatpush1.msra.mxu0 %v1071
    %1073 = vmatprep.subr.mxu0 0.0
    %v1074 = vand.u32 %v95, 4294901760
    %1075 = vmatpush1.msra.mxu0 %v1074
    %1076 = vmatprep.subr.mxu0 0.0
    %v1077 = vand.u32 %v96, 4294901760
    %1078 = vmatpush1.msra.mxu0 %v1077
    %1079 = vmatprep.subr.mxu0 0.0
    %v1080 = vand.u32 %v97, 4294901760
    %1081 = vmatpush1.msra.mxu0 %v1080
    %1082 = vmatprep.subr.mxu0 0.0
    %v1083 = vand.u32 %v98, 4294901760
    %1084 = vmatpush1.msra.mxu0 %v1083
    %1085 = vmatprep.subr.mxu0 0.0
    %v1086 = vand.u32 %v99, 4294901760
    %1087 = vmatpush1.msra.mxu0 %v1086
    %1088 = vmatprep.subr.mxu0 0.0
    %v1089 = vand.u32 %v100, 4294901760
    %1090 = vmatpush1.msra.mxu0 %v1089
    %1091 = vmatprep.subr.mxu0 0.0
    %v1092 = vand.u32 %v101, 4294901760
    %1093 = vmatpush1.msra.mxu0 %v1092
    %1094 = vmatprep.subr.mxu0 0.0
    %v1095 = vand.u32 %v102, 4294901760
    %1096 = vmatpush1.msra.mxu0 %v1095
    %1097 = vmatprep.subr.mxu0 0.0
    %v1098 = vand.u32 %v103, 4294901760
    %1099 = vmatpush1.msra.mxu0 %v1098
    %1100 = vmatprep.subr.mxu0 0.0
    %v1101 = vand.u32 %v104, 4294901760
    %1102 = vmatpush1.msra.mxu0 %v1101
    %1103 = vmatprep.subr.mxu0 0.0
    %v1104 = vand.u32 %v105, 4294901760
    %1105 = vmatpush1.msra.mxu0 %v1104
    %1106 = vmatprep.subr.mxu0 0.0
    %v1107 = vand.u32 %v106, 4294901760
    %1108 = vmatpush1.msra.mxu0 %v1107
    %1109 = vmatprep.subr.mxu0 0.0
    %v1110 = vand.u32 %v107, 4294901760
    %1111 = vmatpush1.msra.mxu0 %v1110
    %1112 = vmatprep.subr.mxu0 0.0
    %v1113 = vand.u32 %v108, 4294901760
    %1114 = vmatpush1.msra.mxu0 %v1113
    %1115 = vmatprep.subr.mxu0 0.0
    %v1116 = vand.u32 %v109, 4294901760
    %1117 = vmatpush1.msra.mxu0 %v1116
    %1118 = vmatprep.subr.mxu0 0.0
    %v1119 = vand.u32 %v110, 4294901760
    %1120 = vmatpush1.msra.mxu0 %v1119
    %1121 = vmatprep.subr.mxu0 0.0
    %v1122 = vand.u32 %v111, 4294901760
    %1123 = vmatpush1.msra.mxu0 %v1122
    %1124 = vmatprep.subr.mxu0 0.0
    %v1125 = vand.u32 %v112, 4294901760
    %1126 = vmatpush1.msra.mxu0 %v1125
    %v1127 = vand.u32 %v44, 4294901760
    %v1128 = vsub.f32 %v44, %v1127
    %v1129 = vand.u32 %v1128, 4294901760
    %v1130 = vsub.f32 %v1128, %v1129
    %v1131 = vand.u32 %v1130, 4294901760
    %1132 = vmatprep.mubr.f32.mxu0 %v1131
    %v1133 = vand.u32 %v43, 4294901760
    %v1134 = vsub.f32 %v43, %v1133
    %v1135 = vand.u32 %v1134, 4294901760
    %v1136 = vsub.f32 %v1134, %v1135
    %v1137 = vand.u32 %v1136, 4294901760
    %1138 = vmatmul.mubr.f32.gmra.mrb[0].mxu0 %v1137
    %v1139 = vpop.f32.mrb[0].mxu0
    %v1140 = vadd.f32 %v1021, %v1139
    %v1141 = vpop.f32.mrb[0].mxu0
    %v1142 = vand.u32 %v48, 4294901760
    %v1143 = vsub.f32 %v48, %v1142
    %v1144 = vand.u32 %v1143, 4294901760
    %v1145 = vsub.f32 %v1143, %v1144
    %v1146 = vand.u32 %v1145, 4294901760
    %1147 = vmatprep.mubr.f32.mxu0 %v1146
    %v1148 = vand.u32 %v47, 4294901760
    %v1149 = vsub.f32 %v47, %v1148
    %v1150 = vand.u32 %v1149, 4294901760
    %v1151 = vsub.f32 %v1149, %v1150
    %v1152 = vand.u32 %v1151, 4294901760
    %1153 = vmatmul.mubr.f32.gmra.mrb[0].mxu0 %v1152
    %v1154 = vpop.f32.mrb[0].mxu0
    %v1155 = vadd.f32 %v1028, %v1154
    %v1156 = vpop.f32.mrb[0].mxu0
    %1157 = vdwg.mxu0
    %1158 = vmatprep.subr.mxu0 0.0
    %v1159 = vand.u32 %v81, 4294901760
    %v1160 = vsub.f32 %v81, %v1159
    %v1161 = vand.u32 %v1160, 4294901760
    %v1162 = vsub.f32 %v1160, %v1161
    %v1163 = vand.u32 %v1162, 4294901760
    %1164 = vmatpush1.msra.mxu0 %v1163
    %1165 = vmatprep.subr.mxu0 0.0
    %v1166 = vand.u32 %v82, 4294901760
    %v1167 = vsub.f32 %v82, %v1166
    %v1168 = vand.u32 %v1167, 4294901760
    %v1169 = vsub.f32 %v1167, %v1168
    %v1170 = vand.u32 %v1169, 4294901760
    %1171 = vmatpush1.msra.mxu0 %v1170
    %1172 = vmatprep.subr.mxu0 0.0
    %v1173 = vand.u32 %v83, 4294901760
    %v1174 = vsub.f32 %v83, %v1173
    %v1175 = vand.u32 %v1174, 4294901760
    %v1176 = vsub.f32 %v1174, %v1175
    %v1177 = vand.u32 %v1176, 4294901760
    %1178 = vmatpush1.msra.mxu0 %v1177
    %1179 = vmatprep.subr.mxu0 0.0
    %v1180 = vand.u32 %v84, 4294901760
    %v1181 = vsub.f32 %v84, %v1180
    %v1182 = vand.u32 %v1181, 4294901760
    %v1183 = vsub.f32 %v1181, %v1182
    %v1184 = vand.u32 %v1183, 4294901760
    %1185 = vmatpush1.msra.mxu0 %v1184
    %1186 = vmatprep.subr.mxu0 0.0
    %v1187 = vand.u32 %v85, 4294901760
    %v1188 = vsub.f32 %v85, %v1187
    %v1189 = vand.u32 %v1188, 4294901760
    %v1190 = vsub.f32 %v1188, %v1189
    %v1191 = vand.u32 %v1190, 4294901760
    %1192 = vmatpush1.msra.mxu0 %v1191
    %1193 = vmatprep.subr.mxu0 0.0
    %v1194 = vand.u32 %v86, 4294901760
    %v1195 = vsub.f32 %v86, %v1194
    %v1196 = vand.u32 %v1195, 4294901760
    %v1197 = vsub.f32 %v1195, %v1196
    %v1198 = vand.u32 %v1197, 4294901760
    %1199 = vmatpush1.msra.mxu0 %v1198
    %1200 = vmatprep.subr.mxu0 0.0
    %v1201 = vand.u32 %v87, 4294901760
    %v1202 = vsub.f32 %v87, %v1201
    %v1203 = vand.u32 %v1202, 4294901760
    %v1204 = vsub.f32 %v1202, %v1203
    %v1205 = vand.u32 %v1204, 4294901760
    %1206 = vmatpush1.msra.mxu0 %v1205
    %1207 = vmatprep.subr.mxu0 0.0
    %v1208 = vand.u32 %v88, 4294901760
    %v1209 = vsub.f32 %v88, %v1208
    %v1210 = vand.u32 %v1209, 4294901760
    %v1211 = vsub.f32 %v1209, %v1210
    %v1212 = vand.u32 %v1211, 4294901760
    %1213 = vmatpush1.msra.mxu0 %v1212
    %1214 = vmatprep.subr.mxu0 0.0
    %v1215 = vand.u32 %v89, 4294901760
    %v1216 = vsub.f32 %v89, %v1215
    %v1217 = vand.u32 %v1216, 4294901760
    %v1218 = vsub.f32 %v1216, %v1217
    %v1219 = vand.u32 %v1218, 4294901760
    %1220 = vmatpush1.msra.mxu0 %v1219
    %1221 = vmatprep.subr.mxu0 0.0
    %v1222 = vand.u32 %v90, 4294901760
    %v1223 = vsub.f32 %v90, %v1222
    %v1224 = vand.u32 %v1223, 4294901760
    %v1225 = vsub.f32 %v1223, %v1224
    %v1226 = vand.u32 %v1225, 4294901760
    %1227 = vmatpush1.msra.mxu0 %v1226
    %1228 = vmatprep.subr.mxu0 0.0
    %v1229 = vand.u32 %v91, 4294901760
    %v1230 = vsub.f32 %v91, %v1229
    %v1231 = vand.u32 %v1230, 4294901760
    %v1232 = vsub.f32 %v1230, %v1231
    %v1233 = vand.u32 %v1232, 4294901760
    %1234 = vmatpush1.msra.mxu0 %v1233
    %1235 = vmatprep.subr.mxu0 0.0
    %v1236 = vand.u32 %v92, 4294901760
    %v1237 = vsub.f32 %v92, %v1236
    %v1238 = vand.u32 %v1237, 4294901760
    %v1239 = vsub.f32 %v1237, %v1238
    %v1240 = vand.u32 %v1239, 4294901760
    %1241 = vmatpush1.msra.mxu0 %v1240
    %1242 = vmatprep.subr.mxu0 0.0
    %v1243 = vand.u32 %v93, 4294901760
    %v1244 = vsub.f32 %v93, %v1243
    %v1245 = vand.u32 %v1244, 4294901760
    %v1246 = vsub.f32 %v1244, %v1245
    %v1247 = vand.u32 %v1246, 4294901760
    %1248 = vmatpush1.msra.mxu0 %v1247
    %1249 = vmatprep.subr.mxu0 0.0
    %v1250 = vand.u32 %v94, 4294901760
    %v1251 = vsub.f32 %v94, %v1250
    %v1252 = vand.u32 %v1251, 4294901760
    %v1253 = vsub.f32 %v1251, %v1252
    %v1254 = vand.u32 %v1253, 4294901760
    %1255 = vmatpush1.msra.mxu0 %v1254
    %1256 = vmatprep.subr.mxu0 0.0
    %v1257 = vand.u32 %v95, 4294901760
    %v1258 = vsub.f32 %v95, %v1257
    %v1259 = vand.u32 %v1258, 4294901760
    %v1260 = vsub.f32 %v1258, %v1259
    %v1261 = vand.u32 %v1260, 4294901760
    %1262 = vmatpush1.msra.mxu0 %v1261
    %1263 = vmatprep.subr.mxu0 0.0
    %v1264 = vand.u32 %v96, 4294901760
    %v1265 = vsub.f32 %v96, %v1264
    %v1266 = vand.u32 %v1265, 4294901760
    %v1267 = vsub.f32 %v1265, %v1266
    %v1268 = vand.u32 %v1267, 4294901760
    %1269 = vmatpush1.msra.mxu0 %v1268
    %1270 = vmatprep.subr.mxu0 0.0
    %v1271 = vand.u32 %v97, 4294901760
    %v1272 = vsub.f32 %v97, %v1271
    %v1273 = vand.u32 %v1272, 4294901760
    %v1274 = vsub.f32 %v1272, %v1273
    %v1275 = vand.u32 %v1274, 4294901760
    %1276 = vmatpush1.msra.mxu0 %v1275
    %1277 = vmatprep.subr.mxu0 0.0
    %v1278 = vand.u32 %v98, 4294901760
    %v1279 = vsub.f32 %v98, %v1278
    %v1280 = vand.u32 %v1279, 4294901760
    %v1281 = vsub.f32 %v1279, %v1280
    %v1282 = vand.u32 %v1281, 4294901760
    %1283 = vmatpush1.msra.mxu0 %v1282
    %1284 = vmatprep.subr.mxu0 0.0
    %v1285 = vand.u32 %v99, 4294901760
    %v1286 = vsub.f32 %v99, %v1285
    %v1287 = vand.u32 %v1286, 4294901760
    %v1288 = vsub.f32 %v1286, %v1287
    %v1289 = vand.u32 %v1288, 4294901760
    %1290 = vmatpush1.msra.mxu0 %v1289
    %1291 = vmatprep.subr.mxu0 0.0
    %v1292 = vand.u32 %v100, 4294901760
    %v1293 = vsub.f32 %v100, %v1292
    %v1294 = vand.u32 %v1293, 4294901760
    %v1295 = vsub.f32 %v1293, %v1294
    %v1296 = vand.u32 %v1295, 4294901760
    %1297 = vmatpush1.msra.mxu0 %v1296
    %1298 = vmatprep.subr.mxu0 0.0
    %v1299 = vand.u32 %v101, 4294901760
    %v1300 = vsub.f32 %v101, %v1299
    %v1301 = vand.u32 %v1300, 4294901760
    %v1302 = vsub.f32 %v1300, %v1301
    %v1303 = vand.u32 %v1302, 4294901760
    %1304 = vmatpush1.msra.mxu0 %v1303
    %1305 = vmatprep.subr.mxu0 0.0
    %v1306 = vand.u32 %v102, 4294901760
    %v1307 = vsub.f32 %v102, %v1306
    %v1308 = vand.u32 %v1307, 4294901760
    %v1309 = vsub.f32 %v1307, %v1308
    %v1310 = vand.u32 %v1309, 4294901760
    %1311 = vmatpush1.msra.mxu0 %v1310
    %1312 = vmatprep.subr.mxu0 0.0
    %v1313 = vand.u32 %v103, 4294901760
    %v1314 = vsub.f32 %v103, %v1313
    %v1315 = vand.u32 %v1314, 4294901760
    %v1316 = vsub.f32 %v1314, %v1315
    %v1317 = vand.u32 %v1316, 4294901760
    %1318 = vmatpush1.msra.mxu0 %v1317
    %1319 = vmatprep.subr.mxu0 0.0
    %v1320 = vand.u32 %v104, 4294901760
    %v1321 = vsub.f32 %v104, %v1320
    %v1322 = vand.u32 %v1321, 4294901760
    %v1323 = vsub.f32 %v1321, %v1322
    %v1324 = vand.u32 %v1323, 4294901760
    %1325 = vmatpush1.msra.mxu0 %v1324
    %1326 = vmatprep.subr.mxu0 0.0
    %v1327 = vand.u32 %v105, 4294901760
    %v1328 = vsub.f32 %v105, %v1327
    %v1329 = vand.u32 %v1328, 4294901760
    %v1330 = vsub.f32 %v1328, %v1329
    %v1331 = vand.u32 %v1330, 4294901760
    %1332 = vmatpush1.msra.mxu0 %v1331
    %1333 = vmatprep.subr.mxu0 0.0
    %v1334 = vand.u32 %v106, 4294901760
    %v1335 = vsub.f32 %v106, %v1334
    %v1336 = vand.u32 %v1335, 4294901760
    %v1337 = vsub.f32 %v1335, %v1336
    %v1338 = vand.u32 %v1337, 4294901760
    %1339 = vmatpush1.msra.mxu0 %v1338
    %1340 = vmatprep.subr.mxu0 0.0
    %v1341 = vand.u32 %v107, 4294901760
    %v1342 = vsub.f32 %v107, %v1341
    %v1343 = vand.u32 %v1342, 4294901760
    %v1344 = vsub.f32 %v1342, %v1343
    %v1345 = vand.u32 %v1344, 4294901760
    %1346 = vmatpush1.msra.mxu0 %v1345
    %1347 = vmatprep.subr.mxu0 0.0
    %v1348 = vand.u32 %v108, 4294901760
    %v1349 = vsub.f32 %v108, %v1348
    %v1350 = vand.u32 %v1349, 4294901760
    %v1351 = vsub.f32 %v1349, %v1350
    %v1352 = vand.u32 %v1351, 4294901760
    %1353 = vmatpush1.msra.mxu0 %v1352
    %1354 = vmatprep.subr.mxu0 0.0
    %v1355 = vand.u32 %v109, 4294901760
    %v1356 = vsub.f32 %v109, %v1355
    %v1357 = vand.u32 %v1356, 4294901760
    %v1358 = vsub.f32 %v1356, %v1357
    %v1359 = vand.u32 %v1358, 4294901760
    %1360 = vmatpush1.msra.mxu0 %v1359
    %1361 = vmatprep.subr.mxu0 0.0
    %v1362 = vand.u32 %v110, 4294901760
    %v1363 = vsub.f32 %v110, %v1362
    %v1364 = vand.u32 %v1363, 4294901760
    %v1365 = vsub.f32 %v1363, %v1364
    %v1366 = vand.u32 %v1365, 4294901760
    %1367 = vmatpush1.msra.mxu0 %v1366
    %1368 = vmatprep.subr.mxu0 0.0
    %v1369 = vand.u32 %v111, 4294901760
    %v1370 = vsub.f32 %v111, %v1369
    %v1371 = vand.u32 %v1370, 4294901760
    %v1372 = vsub.f32 %v1370, %v1371
    %v1373 = vand.u32 %v1372, 4294901760
    %1374 = vmatpush1.msra.mxu0 %v1373
    %1375 = vmatprep.subr.mxu0 0.0
    %v1376 = vand.u32 %v112, 4294901760
    %v1377 = vsub.f32 %v112, %v1376
    %v1378 = vand.u32 %v1377, 4294901760
    %v1379 = vsub.f32 %v1377, %v1378
    %v1380 = vand.u32 %v1379, 4294901760
    %1381 = vmatpush1.msra.mxu0 %v1380
    %v1382 = vand.u32 %v44, 4294901760
    %1383 = vmatprep.mubr.f32.mxu0 %v1382
    %v1384 = vand.u32 %v43, 4294901760
    %1385 = vmatmul.mubr.f32.gmra.mrb[0].mxu0 %v1384
    %v1386 = vpop.f32.mrb[0].mxu0
    %v1387 = vadd.f32 %v1140, %v1386
    %v1388 = vpop.f32.mrb[0].mxu0
    %v1389 = vand.u32 %v48, 4294901760
    %1390 = vmatprep.mubr.f32.mxu0 %v1389
    %v1391 = vand.u32 %v47, 4294901760
    %1392 = vmatmul.mubr.f32.gmra.mrb[0].mxu0 %v1391
    %v1393 = vpop.f32.mrb[0].mxu0
    %v1394 = vadd.f32 %v1155, %v1393
    %v1395 = vpop.f32.mrb[0].mxu0
    %1396 = vdwg.mxu0
    %1397 = vmatprep.subr.mxu0 0.0
    %v1398 = vand.u32 %v81, 4294901760
    %v1399 = vsub.f32 %v81, %v1398
    %1400 = vmatpush1.msra.mxu0 %v1399
    %1401 = vmatprep.subr.mxu0 0.0
    %v1402 = vand.u32 %v82, 4294901760
    %v1403 = vsub.f32 %v82, %v1402
    %1404 = vmatpush1.msra.mxu0 %v1403
    %1405 = vmatprep.subr.mxu0 0.0
    %v1406 = vand.u32 %v83, 4294901760
    %v1407 = vsub.f32 %v83, %v1406
    %1408 = vmatpush1.msra.mxu0 %v1407
    %1409 = vmatprep.subr.mxu0 0.0
    %v1410 = vand.u32 %v84, 4294901760
    %v1411 = vsub.f32 %v84, %v1410
    %1412 = vmatpush1.msra.mxu0 %v1411
    %1413 = vmatprep.subr.mxu0 0.0
    %v1414 = vand.u32 %v85, 4294901760
    %v1415 = vsub.f32 %v85, %v1414
    %1416 = vmatpush1.msra.mxu0 %v1415
    %1417 = vmatprep.subr.mxu0 0.0
    %v1418 = vand.u32 %v86, 4294901760
    %v1419 = vsub.f32 %v86, %v1418
    %1420 = vmatpush1.msra.mxu0 %v1419
    %1421 = vmatprep.subr.mxu0 0.0
    %v1422 = vand.u32 %v87, 4294901760
    %v1423 = vsub.f32 %v87, %v1422
    %1424 = vmatpush1.msra.mxu0 %v1423
    %1425 = vmatprep.subr.mxu0 0.0
    %v1426 = vand.u32 %v88, 4294901760
    %v1427 = vsub.f32 %v88, %v1426
    %1428 = vmatpush1.msra.mxu0 %v1427
    %1429 = vmatprep.subr.mxu0 0.0
    %v1430 = vand.u32 %v89, 4294901760
    %v1431 = vsub.f32 %v89, %v1430
    %1432 = vmatpush1.msra.mxu0 %v1431
    %1433 = vmatprep.subr.mxu0 0.0
    %v1434 = vand.u32 %v90, 4294901760
    %v1435 = vsub.f32 %v90, %v1434
    %1436 = vmatpush1.msra.mxu0 %v1435
    %1437 = vmatprep.subr.mxu0 0.0
    %v1438 = vand.u32 %v91, 4294901760
    %v1439 = vsub.f32 %v91, %v1438
    %1440 = vmatpush1.msra.mxu0 %v1439
    %1441 = vmatprep.subr.mxu0 0.0
    %v1442 = vand.u32 %v92, 4294901760
    %v1443 = vsub.f32 %v92, %v1442
    %1444 = vmatpush1.msra.mxu0 %v1443
    %1445 = vmatprep.subr.mxu0 0.0
    %v1446 = vand.u32 %v93, 4294901760
    %v1447 = vsub.f32 %v93, %v1446
    %1448 = vmatpush1.msra.mxu0 %v1447
    %1449 = vmatprep.subr.mxu0 0.0
    %v1450 = vand.u32 %v94, 4294901760
    %v1451 = vsub.f32 %v94, %v1450
    %1452 = vmatpush1.msra.mxu0 %v1451
    %1453 = vmatprep.subr.mxu0 0.0
    %v1454 = vand.u32 %v95, 4294901760
    %v1455 = vsub.f32 %v95, %v1454
    %1456 = vmatpush1.msra.mxu0 %v1455
    %1457 = vmatprep.subr.mxu0 0.0
    %v1458 = vand.u32 %v96, 4294901760
    %v1459 = vsub.f32 %v96, %v1458
    %1460 = vmatpush1.msra.mxu0 %v1459
    %1461 = vmatprep.subr.mxu0 0.0
    %v1462 = vand.u32 %v97, 4294901760
    %v1463 = vsub.f32 %v97, %v1462
    %1464 = vmatpush1.msra.mxu0 %v1463
    %1465 = vmatprep.subr.mxu0 0.0
    %v1466 = vand.u32 %v98, 4294901760
    %v1467 = vsub.f32 %v98, %v1466
    %1468 = vmatpush1.msra.mxu0 %v1467
    %1469 = vmatprep.subr.mxu0 0.0
    %v1470 = vand.u32 %v99, 4294901760
    %v1471 = vsub.f32 %v99, %v1470
    %1472 = vmatpush1.msra.mxu0 %v1471
    %1473 = vmatprep.subr.mxu0 0.0
    %v1474 = vand.u32 %v100, 4294901760
    %v1475 = vsub.f32 %v100, %v1474
    %1476 = vmatpush1.msra.mxu0 %v1475
    %1477 = vmatprep.subr.mxu0 0.0
    %v1478 = vand.u32 %v101, 4294901760
    %v1479 = vsub.f32 %v101, %v1478
    %1480 = vmatpush1.msra.mxu0 %v1479
    %1481 = vmatprep.subr.mxu0 0.0
    %v1482 = vand.u32 %v102, 4294901760
    %v1483 = vsub.f32 %v102, %v1482
    %1484 = vmatpush1.msra.mxu0 %v1483
    %1485 = vmatprep.subr.mxu0 0.0
    %v1486 = vand.u32 %v103, 4294901760
    %v1487 = vsub.f32 %v103, %v1486
    %1488 = vmatpush1.msra.mxu0 %v1487
    %1489 = vmatprep.subr.mxu0 0.0
    %v1490 = vand.u32 %v104, 4294901760
    %v1491 = vsub.f32 %v104, %v1490
    %1492 = vmatpush1.msra.mxu0 %v1491
    %1493 = vmatprep.subr.mxu0 0.0
    %v1494 = vand.u32 %v105, 4294901760
    %v1495 = vsub.f32 %v105, %v1494
    %1496 = vmatpush1.msra.mxu0 %v1495
    %1497 = vmatprep.subr.mxu0 0.0
    %v1498 = vand.u32 %v106, 4294901760
    %v1499 = vsub.f32 %v106, %v1498
    %1500 = vmatpush1.msra.mxu0 %v1499
    %1501 = vmatprep.subr.mxu0 0.0
    %v1502 = vand.u32 %v107, 4294901760
    %v1503 = vsub.f32 %v107, %v1502
    %1504 = vmatpush1.msra.mxu0 %v1503
    %1505 = vmatprep.subr.mxu0 0.0
    %v1506 = vand.u32 %v108, 4294901760
    %v1507 = vsub.f32 %v108, %v1506
    %1508 = vmatpush1.msra.mxu0 %v1507
    %1509 = vmatprep.subr.mxu0 0.0
    %v1510 = vand.u32 %v109, 4294901760
    %v1511 = vsub.f32 %v109, %v1510
    %1512 = vmatpush1.msra.mxu0 %v1511
    %1513 = vmatprep.subr.mxu0 0.0
    %v1514 = vand.u32 %v110, 4294901760
    %v1515 = vsub.f32 %v110, %v1514
    %1516 = vmatpush1.msra.mxu0 %v1515
    %1517 = vmatprep.subr.mxu0 0.0
    %v1518 = vand.u32 %v111, 4294901760
    %v1519 = vsub.f32 %v111, %v1518
    %1520 = vmatpush1.msra.mxu0 %v1519
    %1521 = vmatprep.subr.mxu0 0.0
    %v1522 = vand.u32 %v112, 4294901760
    %v1523 = vsub.f32 %v112, %v1522
    %1524 = vmatpush1.msra.mxu0 %v1523
    %v1525 = vand.u32 %v44, 4294901760
    %v1526 = vsub.f32 %v44, %v1525
    %1527 = vmatprep.mubr.f32.mxu0 %v1526
    %v1528 = vand.u32 %v43, 4294901760
    %v1529 = vsub.f32 %v43, %v1528
    %1530 = vmatmul.mubr.f32.gmra.mrb[0].mxu0 %v1529
    %v1531 = vpop.f32.mrb[0].mxu0
    %v1532 = vadd.f32 %v1387, %v1531
    %v1533 = vpop.f32.mrb[0].mxu0
    %v1534 = vand.u32 %v48, 4294901760
    %v1535 = vsub.f32 %v48, %v1534
    %1536 = vmatprep.mubr.f32.mxu0 %v1535
    %v1537 = vand.u32 %v47, 4294901760
    %v1538 = vsub.f32 %v47, %v1537
    %1539 = vmatmul.mubr.f32.gmra.mrb[0].mxu0 %v1538
    %v1540 = vpop.f32.mrb[0].mxu0
    %v1541 = vadd.f32 %v1394, %v1540
    %v1542 = vpop.f32.mrb[0].mxu0
    %1543 = vdwg.mxu0
    %1544 = vmatprep.subr.mxu0 0.0
    %v1545 = vand.u32 %v81, 4294901760
    %1546 = vmatpush1.msra.mxu0 %v1545
    %1547 = vmatprep.subr.mxu0 0.0
    %v1548 = vand.u32 %v82, 4294901760
    %1549 = vmatpush1.msra.mxu0 %v1548
    %1550 = vmatprep.subr.mxu0 0.0
    %v1551 = vand.u32 %v83, 4294901760
    %1552 = vmatpush1.msra.mxu0 %v1551
    %1553 = vmatprep.subr.mxu0 0.0
    %v1554 = vand.u32 %v84, 4294901760
    %1555 = vmatpush1.msra.mxu0 %v1554
    %1556 = vmatprep.subr.mxu0 0.0
    %v1557 = vand.u32 %v85, 4294901760
    %1558 = vmatpush1.msra.mxu0 %v1557
    %1559 = vmatprep.subr.mxu0 0.0
    %v1560 = vand.u32 %v86, 4294901760
    %1561 = vmatpush1.msra.mxu0 %v1560
    %1562 = vmatprep.subr.mxu0 0.0
    %v1563 = vand.u32 %v87, 4294901760
    %1564 = vmatpush1.msra.mxu0 %v1563
    %1565 = vmatprep.subr.mxu0 0.0
    %v1566 = vand.u32 %v88, 4294901760
    %1567 = vmatpush1.msra.mxu0 %v1566
    %1568 = vmatprep.subr.mxu0 0.0
    %v1569 = vand.u32 %v89, 4294901760
    %1570 = vmatpush1.msra.mxu0 %v1569
    %1571 = vmatprep.subr.mxu0 0.0
    %v1572 = vand.u32 %v90, 4294901760
    %1573 = vmatpush1.msra.mxu0 %v1572
    %1574 = vmatprep.subr.mxu0 0.0
    %v1575 = vand.u32 %v91, 4294901760
    %1576 = vmatpush1.msra.mxu0 %v1575
    %1577 = vmatprep.subr.mxu0 0.0
    %v1578 = vand.u32 %v92, 4294901760
    %1579 = vmatpush1.msra.mxu0 %v1578
    %1580 = vmatprep.subr.mxu0 0.0
    %v1581 = vand.u32 %v93, 4294901760
    %1582 = vmatpush1.msra.mxu0 %v1581
    %1583 = vmatprep.subr.mxu0 0.0
    %v1584 = vand.u32 %v94, 4294901760
    %1585 = vmatpush1.msra.mxu0 %v1584
    %1586 = vmatprep.subr.mxu0 0.0
    %v1587 = vand.u32 %v95, 4294901760
    %1588 = vmatpush1.msra.mxu0 %v1587
    %1589 = vmatprep.subr.mxu0 0.0
    %v1590 = vand.u32 %v96, 4294901760
    %1591 = vmatpush1.msra.mxu0 %v1590
    %1592 = vmatprep.subr.mxu0 0.0
    %v1593 = vand.u32 %v97, 4294901760
    %1594 = vmatpush1.msra.mxu0 %v1593
    %1595 = vmatprep.subr.mxu0 0.0
    %v1596 = vand.u32 %v98, 4294901760
    %1597 = vmatpush1.msra.mxu0 %v1596
    %1598 = vmatprep.subr.mxu0 0.0
    %v1599 = vand.u32 %v99, 4294901760
    %1600 = vmatpush1.msra.mxu0 %v1599
    %1601 = vmatprep.subr.mxu0 0.0
    %v1602 = vand.u32 %v100, 4294901760
    %1603 = vmatpush1.msra.mxu0 %v1602
    %1604 = vmatprep.subr.mxu0 0.0
    %v1605 = vand.u32 %v101, 4294901760
    %1606 = vmatpush1.msra.mxu0 %v1605
    %1607 = vmatprep.subr.mxu0 0.0
    %v1608 = vand.u32 %v102, 4294901760
    %1609 = vmatpush1.msra.mxu0 %v1608
    %1610 = vmatprep.subr.mxu0 0.0
    %v1611 = vand.u32 %v103, 4294901760
    %1612 = vmatpush1.msra.mxu0 %v1611
    %1613 = vmatprep.subr.mxu0 0.0
    %v1614 = vand.u32 %v104, 4294901760
    %1615 = vmatpush1.msra.mxu0 %v1614
    %1616 = vmatprep.subr.mxu0 0.0
    %v1617 = vand.u32 %v105, 4294901760
    %1618 = vmatpush1.msra.mxu0 %v1617
    %1619 = vmatprep.subr.mxu0 0.0
    %v1620 = vand.u32 %v106, 4294901760
    %1621 = vmatpush1.msra.mxu0 %v1620
    %1622 = vmatprep.subr.mxu0 0.0
    %v1623 = vand.u32 %v107, 4294901760
    %1624 = vmatpush1.msra.mxu0 %v1623
    %1625 = vmatprep.subr.mxu0 0.0
    %v1626 = vand.u32 %v108, 4294901760
    %1627 = vmatpush1.msra.mxu0 %v1626
    %1628 = vmatprep.subr.mxu0 0.0
    %v1629 = vand.u32 %v109, 4294901760
    %1630 = vmatpush1.msra.mxu0 %v1629
    %1631 = vmatprep.subr.mxu0 0.0
    %v1632 = vand.u32 %v110, 4294901760
    %1633 = vmatpush1.msra.mxu0 %v1632
    %1634 = vmatprep.subr.mxu0 0.0
    %v1635 = vand.u32 %v111, 4294901760
    %1636 = vmatpush1.msra.mxu0 %v1635
    %1637 = vmatprep.subr.mxu0 0.0
    %v1638 = vand.u32 %v112, 4294901760
    %1639 = vmatpush1.msra.mxu0 %v1638
    %v1640 = vand.u32 %v44, 4294901760
    %v1641 = vsub.f32 %v44, %v1640
    %v1642 = vand.u32 %v1641, 4294901760
    %1643 = vmatprep.mubr.f32.mxu0 %v1642
    %v1644 = vand.u32 %v43, 4294901760
    %v1645 = vsub.f32 %v43, %v1644
    %v1646 = vand.u32 %v1645, 4294901760
    %1647 = vmatmul.mubr.f32.gmra.mrb[0].mxu0 %v1646
    %v1648 = vpop.f32.mrb[0].mxu0
    %v1649 = vadd.f32 %v1532, %v1648
    %v1650 = vpop.f32.mrb[0].mxu0
    %v1651 = vand.u32 %v48, 4294901760
    %v1652 = vsub.f32 %v48, %v1651
    %v1653 = vand.u32 %v1652, 4294901760
    %1654 = vmatprep.mubr.f32.mxu0 %v1653
    %v1655 = vand.u32 %v47, 4294901760
    %v1656 = vsub.f32 %v47, %v1655
    %v1657 = vand.u32 %v1656, 4294901760
    %1658 = vmatmul.mubr.f32.gmra.mrb[0].mxu0 %v1657
    %v1659 = vpop.f32.mrb[0].mxu0
    %v1660 = vadd.f32 %v1541, %v1659
    %v1661 = vpop.f32.mrb[0].mxu0
    %1662 = vdwg.mxu0
    %1663 = vmatprep.subr.mxu0 0.0
    %v1664 = vand.u32 %v81, 4294901760
    %v1665 = vsub.f32 %v81, %v1664
    %v1666 = vand.u32 %v1665, 4294901760
    %1667 = vmatpush1.msra.mxu0 %v1666
    %1668 = vmatprep.subr.mxu0 0.0
    %v1669 = vand.u32 %v82, 4294901760
    %v1670 = vsub.f32 %v82, %v1669
    %v1671 = vand.u32 %v1670, 4294901760
    %1672 = vmatpush1.msra.mxu0 %v1671
    %1673 = vmatprep.subr.mxu0 0.0
    %v1674 = vand.u32 %v83, 4294901760
    %v1675 = vsub.f32 %v83, %v1674
    %v1676 = vand.u32 %v1675, 4294901760
    %1677 = vmatpush1.msra.mxu0 %v1676
    %1678 = vmatprep.subr.mxu0 0.0
    %v1679 = vand.u32 %v84, 4294901760
    %v1680 = vsub.f32 %v84, %v1679
    %v1681 = vand.u32 %v1680, 4294901760
    %1682 = vmatpush1.msra.mxu0 %v1681
    %1683 = vmatprep.subr.mxu0 0.0
    %v1684 = vand.u32 %v85, 4294901760
    %v1685 = vsub.f32 %v85, %v1684
    %v1686 = vand.u32 %v1685, 4294901760
    %1687 = vmatpush1.msra.mxu0 %v1686
    %1688 = vmatprep.subr.mxu0 0.0
    %v1689 = vand.u32 %v86, 4294901760
    %v1690 = vsub.f32 %v86, %v1689
    %v1691 = vand.u32 %v1690, 4294901760
    %1692 = vmatpush1.msra.mxu0 %v1691
    %1693 = vmatprep.subr.mxu0 0.0
    %v1694 = vand.u32 %v87, 4294901760
    %v1695 = vsub.f32 %v87, %v1694
    %v1696 = vand.u32 %v1695, 4294901760
    %1697 = vmatpush1.msra.mxu0 %v1696
    %1698 = vmatprep.subr.mxu0 0.0
    %v1699 = vand.u32 %v88, 4294901760
    %v1700 = vsub.f32 %v88, %v1699
    %v1701 = vand.u32 %v1700, 4294901760
    %1702 = vmatpush1.msra.mxu0 %v1701
    %1703 = vmatprep.subr.mxu0 0.0
    %v1704 = vand.u32 %v89, 4294901760
    %v1705 = vsub.f32 %v89, %v1704
    %v1706 = vand.u32 %v1705, 4294901760
    %1707 = vmatpush1.msra.mxu0 %v1706
    %1708 = vmatprep.subr.mxu0 0.0
    %v1709 = vand.u32 %v90, 4294901760
    %v1710 = vsub.f32 %v90, %v1709
    %v1711 = vand.u32 %v1710, 4294901760
    %1712 = vmatpush1.msra.mxu0 %v1711
    %1713 = vmatprep.subr.mxu0 0.0
    %v1714 = vand.u32 %v91, 4294901760
    %v1715 = vsub.f32 %v91, %v1714
    %v1716 = vand.u32 %v1715, 4294901760
    %1717 = vmatpush1.msra.mxu0 %v1716
    %1718 = vmatprep.subr.mxu0 0.0
    %v1719 = vand.u32 %v92, 4294901760
    %v1720 = vsub.f32 %v92, %v1719
    %v1721 = vand.u32 %v1720, 4294901760
    %1722 = vmatpush1.msra.mxu0 %v1721
    %1723 = vmatprep.subr.mxu0 0.0
    %v1724 = vand.u32 %v93, 4294901760
    %v1725 = vsub.f32 %v93, %v1724
    %v1726 = vand.u32 %v1725, 4294901760
    %1727 = vmatpush1.msra.mxu0 %v1726
    %1728 = vmatprep.subr.mxu0 0.0
    %v1729 = vand.u32 %v94, 4294901760
    %v1730 = vsub.f32 %v94, %v1729
    %v1731 = vand.u32 %v1730, 4294901760
    %1732 = vmatpush1.msra.mxu0 %v1731
    %1733 = vmatprep.subr.mxu0 0.0
    %v1734 = vand.u32 %v95, 4294901760
    %v1735 = vsub.f32 %v95, %v1734
    %v1736 = vand.u32 %v1735, 4294901760
    %1737 = vmatpush1.msra.mxu0 %v1736
    %1738 = vmatprep.subr.mxu0 0.0
    %v1739 = vand.u32 %v96, 4294901760
    %v1740 = vsub.f32 %v96, %v1739
    %v1741 = vand.u32 %v1740, 4294901760
    %1742 = vmatpush1.msra.mxu0 %v1741
    %1743 = vmatprep.subr.mxu0 0.0
    %v1744 = vand.u32 %v97, 4294901760
    %v1745 = vsub.f32 %v97, %v1744
    %v1746 = vand.u32 %v1745, 4294901760
    %1747 = vmatpush1.msra.mxu0 %v1746
    %1748 = vmatprep.subr.mxu0 0.0
    %v1749 = vand.u32 %v98, 4294901760
    %v1750 = vsub.f32 %v98, %v1749
    %v1751 = vand.u32 %v1750, 4294901760
    %1752 = vmatpush1.msra.mxu0 %v1751
    %1753 = vmatprep.subr.mxu0 0.0
    %v1754 = vand.u32 %v99, 4294901760
    %v1755 = vsub.f32 %v99, %v1754
    %v1756 = vand.u32 %v1755, 4294901760
    %1757 = vmatpush1.msra.mxu0 %v1756
    %1758 = vmatprep.subr.mxu0 0.0
    %v1759 = vand.u32 %v100, 4294901760
    %v1760 = vsub.f32 %v100, %v1759
    %v1761 = vand.u32 %v1760, 4294901760
    %1762 = vmatpush1.msra.mxu0 %v1761
    %1763 = vmatprep.subr.mxu0 0.0
    %v1764 = vand.u32 %v101, 4294901760
    %v1765 = vsub.f32 %v101, %v1764
    %v1766 = vand.u32 %v1765, 4294901760
    %1767 = vmatpush1.msra.mxu0 %v1766
    %1768 = vmatprep.subr.mxu0 0.0
    %v1769 = vand.u32 %v102, 4294901760
    %v1770 = vsub.f32 %v102, %v1769
    %v1771 = vand.u32 %v1770, 4294901760
    %1772 = vmatpush1.msra.mxu0 %v1771
    %1773 = vmatprep.subr.mxu0 0.0
    %v1774 = vand.u32 %v103, 4294901760
    %v1775 = vsub.f32 %v103, %v1774
    %v1776 = vand.u32 %v1775, 4294901760
    %1777 = vmatpush1.msra.mxu0 %v1776
    %1778 = vmatprep.subr.mxu0 0.0
    %v1779 = vand.u32 %v104, 4294901760
    %v1780 = vsub.f32 %v104, %v1779
    %v1781 = vand.u32 %v1780, 4294901760
    %1782 = vmatpush1.msra.mxu0 %v1781
    %1783 = vmatprep.subr.mxu0 0.0
    %v1784 = vand.u32 %v105, 4294901760
    %v1785 = vsub.f32 %v105, %v1784
    %v1786 = vand.u32 %v1785, 4294901760
    %1787 = vmatpush1.msra.mxu0 %v1786
    %1788 = vmatprep.subr.mxu0 0.0
    %v1789 = vand.u32 %v106, 4294901760
    %v1790 = vsub.f32 %v106, %v1789
    %v1791 = vand.u32 %v1790, 4294901760
    %1792 = vmatpush1.msra.mxu0 %v1791
    %1793 = vmatprep.subr.mxu0 0.0
    %v1794 = vand.u32 %v107, 4294901760
    %v1795 = vsub.f32 %v107, %v1794
    %v1796 = vand.u32 %v1795, 4294901760
    %1797 = vmatpush1.msra.mxu0 %v1796
    %1798 = vmatprep.subr.mxu0 0.0
    %v1799 = vand.u32 %v108, 4294901760
    %v1800 = vsub.f32 %v108, %v1799
    %v1801 = vand.u32 %v1800, 4294901760
    %1802 = vmatpush1.msra.mxu0 %v1801
    %1803 = vmatprep.subr.mxu0 0.0
    %v1804 = vand.u32 %v109, 4294901760
    %v1805 = vsub.f32 %v109, %v1804
    %v1806 = vand.u32 %v1805, 4294901760
    %1807 = vmatpush1.msra.mxu0 %v1806
    %1808 = vmatprep.subr.mxu0 0.0
    %v1809 = vand.u32 %v110, 4294901760
    %v1810 = vsub.f32 %v110, %v1809
    %v1811 = vand.u32 %v1810, 4294901760
    %1812 = vmatpush1.msra.mxu0 %v1811
    %1813 = vmatprep.subr.mxu0 0.0
    %v1814 = vand.u32 %v111, 4294901760
    %v1815 = vsub.f32 %v111, %v1814
    %v1816 = vand.u32 %v1815, 4294901760
    %1817 = vmatpush1.msra.mxu0 %v1816
    %1818 = vmatprep.subr.mxu0 0.0
    %v1819 = vand.u32 %v112, 4294901760
    %v1820 = vsub.f32 %v112, %v1819
    %v1821 = vand.u32 %v1820, 4294901760
    %1822 = vmatpush1.msra.mxu0 %v1821
    %v1823 = vand.u32 %v44, 4294901760
    %1824 = vmatprep.mubr.f32.mxu0 %v1823
    %v1825 = vand.u32 %v43, 4294901760
    %1826 = vmatmul.mubr.f32.gmra.mrb[0].mxu0 %v1825
    %v1827 = vpop.f32.mrb[0].mxu0
    %v1828 = vadd.f32 %v1649, %v1827
    %v1829 = vpop.f32.mrb[0].mxu0
    %v1830 = vand.u32 %v48, 4294901760
    %1831 = vmatprep.mubr.f32.mxu0 %v1830
    %v1832 = vand.u32 %v47, 4294901760
    %1833 = vmatmul.mubr.f32.gmra.mrb[0].mxu0 %v1832
    %v1834 = vpop.f32.mrb[0].mxu0
    %v1835 = vadd.f32 %v1660, %v1834
    %v1836 = vpop.f32.mrb[0].mxu0
    %1837 = vdwg.mxu0
    %1838 = vmatprep.subr.mxu0 0.0
    %v1839 = vand.u32 %v81, 4294901760
    %1840 = vmatpush1.msra.mxu0 %v1839
    %1841 = vmatprep.subr.mxu0 0.0
    %v1842 = vand.u32 %v82, 4294901760
    %1843 = vmatpush1.msra.mxu0 %v1842
    %1844 = vmatprep.subr.mxu0 0.0
    %v1845 = vand.u32 %v83, 4294901760
    %1846 = vmatpush1.msra.mxu0 %v1845
    %1847 = vmatprep.subr.mxu0 0.0
    %v1848 = vand.u32 %v84, 4294901760
    %1849 = vmatpush1.msra.mxu0 %v1848
    %1850 = vmatprep.subr.mxu0 0.0
    %v1851 = vand.u32 %v85, 4294901760
    %1852 = vmatpush1.msra.mxu0 %v1851
    %1853 = vmatprep.subr.mxu0 0.0
    %v1854 = vand.u32 %v86, 4294901760
    %1855 = vmatpush1.msra.mxu0 %v1854
    %1856 = vmatprep.subr.mxu0 0.0
    %v1857 = vand.u32 %v87, 4294901760
    %1858 = vmatpush1.msra.mxu0 %v1857
    %1859 = vmatprep.subr.mxu0 0.0
    %v1860 = vand.u32 %v88, 4294901760
    %1861 = vmatpush1.msra.mxu0 %v1860
    %1862 = vmatprep.subr.mxu0 0.0
    %v1863 = vand.u32 %v89, 4294901760
    %1864 = vmatpush1.msra.mxu0 %v1863
    %1865 = vmatprep.subr.mxu0 0.0
    %v1866 = vand.u32 %v90, 4294901760
    %1867 = vmatpush1.msra.mxu0 %v1866
    %1868 = vmatprep.subr.mxu0 0.0
    %v1869 = vand.u32 %v91, 4294901760
    %1870 = vmatpush1.msra.mxu0 %v1869
    %1871 = vmatprep.subr.mxu0 0.0
    %v1872 = vand.u32 %v92, 4294901760
    %1873 = vmatpush1.msra.mxu0 %v1872
    %1874 = vmatprep.subr.mxu0 0.0
    %v1875 = vand.u32 %v93, 4294901760
    %1876 = vmatpush1.msra.mxu0 %v1875
    %1877 = vmatprep.subr.mxu0 0.0
    %v1878 = vand.u32 %v94, 4294901760
    %1879 = vmatpush1.msra.mxu0 %v1878
    %1880 = vmatprep.subr.mxu0 0.0
    %v1881 = vand.u32 %v95, 4294901760
    %1882 = vmatpush1.msra.mxu0 %v1881
    %1883 = vmatprep.subr.mxu0 0.0
    %v1884 = vand.u32 %v96, 4294901760
    %1885 = vmatpush1.msra.mxu0 %v1884
    %1886 = vmatprep.subr.mxu0 0.0
    %v1887 = vand.u32 %v97, 4294901760
    %1888 = vmatpush1.msra.mxu0 %v1887
    %1889 = vmatprep.subr.mxu0 0.0
    %v1890 = vand.u32 %v98, 4294901760
    %1891 = vmatpush1.msra.mxu0 %v1890
    %1892 = vmatprep.subr.mxu0 0.0
    %v1893 = vand.u32 %v99, 4294901760
    %1894 = vmatpush1.msra.mxu0 %v1893
    %1895 = vmatprep.subr.mxu0 0.0
    %v1896 = vand.u32 %v100, 4294901760
    %1897 = vmatpush1.msra.mxu0 %v1896
    %1898 = vmatprep.subr.mxu0 0.0
    %v1899 = vand.u32 %v101, 4294901760
    %1900 = vmatpush1.msra.mxu0 %v1899
    %1901 = vmatprep.subr.mxu0 0.0
    %v1902 = vand.u32 %v102, 4294901760
    %1903 = vmatpush1.msra.mxu0 %v1902
    %1904 = vmatprep.subr.mxu0 0.0
    %v1905 = vand.u32 %v103, 4294901760
    %1906 = vmatpush1.msra.mxu0 %v1905
    %1907 = vmatprep.subr.mxu0 0.0
    %v1908 = vand.u32 %v104, 4294901760
    %1909 = vmatpush1.msra.mxu0 %v1908
    %1910 = vmatprep.subr.mxu0 0.0
    %v1911 = vand.u32 %v105, 4294901760
    %1912 = vmatpush1.msra.mxu0 %v1911
    %1913 = vmatprep.subr.mxu0 0.0
    %v1914 = vand.u32 %v106, 4294901760
    %1915 = vmatpush1.msra.mxu0 %v1914
    %1916 = vmatprep.subr.mxu0 0.0
    %v1917 = vand.u32 %v107, 4294901760
    %1918 = vmatpush1.msra.mxu0 %v1917
    %1919 = vmatprep.subr.mxu0 0.0
    %v1920 = vand.u32 %v108, 4294901760
    %1921 = vmatpush1.msra.mxu0 %v1920
    %1922 = vmatprep.subr.mxu0 0.0
    %v1923 = vand.u32 %v109, 4294901760
    %1924 = vmatpush1.msra.mxu0 %v1923
    %1925 = vmatprep.subr.mxu0 0.0
    %v1926 = vand.u32 %v110, 4294901760
    %1927 = vmatpush1.msra.mxu0 %v1926
    %1928 = vmatprep.subr.mxu0 0.0
    %v1929 = vand.u32 %v111, 4294901760
    %1930 = vmatpush1.msra.mxu0 %v1929
    %1931 = vmatprep.subr.mxu0 0.0
    %v1932 = vand.u32 %v112, 4294901760
    %1933 = vmatpush1.msra.mxu0 %v1932
    %v1934 = vand.u32 %v44, 4294901760
    %1935 = vmatprep.mubr.f32.mxu0 %v1934
    %v1936 = vand.u32 %v43, 4294901760
    %1937 = vmatmul.mubr.f32.gmra.mrb[0].mxu0 %v1936
    %v1938 = vpop.f32.mrb[0].mxu0
    %v1939 = vadd.f32 %v1828, %v1938
    %v1940 = vpop.f32.mrb[0].mxu0
    %v1941 = vand.u32 %v48, 4294901760
    %1942 = vmatprep.mubr.f32.mxu0 %v1941
    %v1943 = vand.u32 %v47, 4294901760
    %1944 = vmatmul.mubr.f32.gmra.mrb[0].mxu0 %v1943
    %v1945 = vpop.f32.mrb[0].mxu0
    %v1946 = vadd.f32 %v1835, %v1945
    %v1947 = vpop.f32.mrb[0].mxu0
    %1948 = vdwg.mxu0
    %v1949 = vmul.f32 %v1939, 5.656854
    %v1950 = vmul.f32 %v1946, 5.656854
    %vm1951 = vcmask 261120
    %1952 = vst.msk [vmem:[#allocation2] sm:$0xff] %vm1951, %v1949
    %1953 = vst.msk [vmem:[#allocation2 + $0x8] sm:$0xff] %vm1951, %v1950
    // Predicated region
    $region10: #{tpu_custom_call.1} parent=1 // pred_check
      _
    $region11: #{tpu_custom_call.1} parent=1 // pred_check_branch
      %1955 = sbr.rel (0) target = $region13
    $region12: #{tpu_custom_call.1} parent=1 // pred_region
      %s1957 = ssub.s32 256, 256
      %1958 = vsyncadd [#allocation3], %s1957
      %s1959 = sshll.u32 [#allocation2], 4
      %s1960 = int_to_ptr.vmem [resolvable:$true] %s1959
      %1965 = dma.vmem_to_hbm [thread:$0]  %s1960, 256, %s2, [#allocation3], 128, 128, 8
    $region13: #{tpu_custom_call.1} parent=1 // pred_fallthru
      _
    // Predicated region
    $region14: #{tpu_custom_call.1} parent=1 // pred_check
      _
    $region15: #{tpu_custom_call.1} parent=1 // pred_check_branch
      %1967 = sbr.rel (0) target = $region17
    $region16: #{tpu_custom_call.1} parent=1 // pred_region
      %1968 = dma.done [#allocation3], 256
    $region17: #{tpu_custom_call.1} parent=1 // pred_fallthru
      _
    %1969 = vsyncpa [#allocation3], 1

</llo_original>
